<compile_context>
chip_gen: v5e
topology: v5e:2x2
jax: 0.10.0
libtpu: 0.0.40
codegen_flags: <defaults>
</compile_context>

<pallas_src>
import functools

import jax
import jax.numpy as jnp
from jax.experimental import pallas as pl
from jax.experimental.pallas import tpu as pltpu


# -----------------------------------------------------------------------------
# Pallas kernels
# -----------------------------------------------------------------------------
def _conv_relu_pool_kernel(p0_ref, p1_ref, p2_ref, p3_ref, w_ref, b_ref, o_ref):
    """Fused Conv(im2col matmul) + bias + ReLU + 2x2 max-pool.

    p{0..3}: [Mp, K] im2col patches for the 4 positions of each pooling window
             (Mp = B*Ho*Wo).  w: [K, Cout].  b: [1, Cout].  o: [Mp, Cout].
    Uses max_k(p_k @ W) + b then ReLU, which equals maxpool(relu(conv+b)).
    """
    w = w_ref[...]
    m01 = jnp.maximum(
        jnp.dot(p0_ref[...], w, preferred_element_type=jnp.float32),
        jnp.dot(p1_ref[...], w, preferred_element_type=jnp.float32),
    )
    m23 = jnp.maximum(
        jnp.dot(p2_ref[...], w, preferred_element_type=jnp.float32),
        jnp.dot(p3_ref[...], w, preferred_element_type=jnp.float32),
    )
    acc = jnp.maximum(m01, m23) + b_ref[...]          # broadcast [1, Cout]
    o_ref[...] = jnp.maximum(acc, 0.0).astype(o_ref.dtype)


def _matmul_bias_kernel(x_ref, w_ref, b_ref, o_ref, *, apply_relu):
    """o = relu?(x @ w + b).  x:[M,K] w:[K,N] b:[1,N] o:[M,N]."""
    acc = jnp.dot(x_ref[...], w_ref[...], preferred_element_type=jnp.float32)
    acc = acc + b_ref[...]
    if apply_relu:
        acc = jnp.maximum(acc, 0.0)
    o_ref[...] = acc.astype(o_ref.dtype)


# -----------------------------------------------------------------------------
# Pallas call wrappers
# -----------------------------------------------------------------------------
def conv_relu_pool(p_full, w_mat, b):
    """Fused conv+relu+2x2pool.

    p_full: [B, H, W, K] im2col patches at every conv output position.
    w_mat:  [K, Cout], b: [Cout].  Returns [B, H//2, W//2, Cout].
    """
    B, H, W, K = p_full.shape
    Cout = w_mat.shape[1]
    Ho, Wo = H // 2, W // 2
    Mp = B * Ho * Wo

    # Four strided views: the im2col rows corresponding to the four positions
    # of every 2x2 pooling window (pure layout glue in JAX).
    views = [
        p_full[:, dy::2, dx::2, :].reshape(Mp, K).astype(jnp.float32)
        for dy in (0, 1)
        for dx in (0, 1)
    ]
    b2 = b.reshape(1, Cout).astype(jnp.float32)
    w_mat = w_mat.astype(jnp.float32)

    out = pl.pallas_call(
        _conv_relu_pool_kernel,
        out_shape=jax.ShapeDtypeStruct((Mp, Cout), jnp.float32),
        grid=(1,),
        in_specs=[pl.BlockSpec((Mp, K), lambda i: (0, 0))] * 4
        + [
            pl.BlockSpec((K, Cout), lambda i: (0, 0)),
            pl.BlockSpec((1, Cout), lambda i: (0, 0)),
        ],
        out_specs=pl.BlockSpec((Mp, Cout), lambda i: (0, 0)),
        compiler_params=pltpu.CompilerParams(
            dimension_semantics=("arbitrary",)
        ),
    )(*views, w_mat, b2)
    return out.reshape(B, Ho, Wo, Cout)


def fused_matmul_bias(x, w, b, *, apply_relu=False):
    """Pallas call for relu?(x @ w + b); whole operands fit in VMEM here."""
    M, K = x.shape
    K2, N = w.shape
    assert K == K2
    b2 = b.reshape(1, N).astype(jnp.float32)
    kernel = functools.partial(_matmul_bias_kernel, apply_relu=apply_relu)
    return pl.pallas_call(
        kernel,
        out_shape=jax.ShapeDtypeStruct((M, N), jnp.float32),
        grid=(1,),
        in_specs=[
            pl.BlockSpec((M, K), lambda i: (0, 0)),
            pl.BlockSpec((K, N), lambda i: (0, 0)),
            pl.BlockSpec((1, N), lambda i: (0, 0)),
        ],
        out_specs=pl.BlockSpec((M, N), lambda i: (0, 0)),
        compiler_params=pltpu.CompilerParams(
            dimension_semantics=("arbitrary",)
        ),
    )(x.astype(jnp.float32), w.astype(jnp.float32), b2)


# -----------------------------------------------------------------------------
# JAX-side glue: im2col, parameter setup, forward pass
# -----------------------------------------------------------------------------
def im2col(x_nhwc, kh, kw, pad):
    """Extract kh*kw patches (with zero padding) -> [B, H, W, kh*kw*Cin].

    Patch feature order is (kh, kw, ci); conv weights are reshaped with the
    same order, so the contraction matches PyTorch's Conv2d exactly.
    """
    B, H, W, C = x_nhwc.shape
    xp = jnp.pad(x_nhwc, ((0, 0), (pad, pad), (pad, pad), (0, 0)))
    patches = []
    for i in range(kh):
        for j in range(kw):
            patches.append(xp[:, i:i + H, j:j + W, :])   # [B, H, W, C]
    p = jnp.stack(patches, axis=3)                        # [B, H, W, kh*kw, C]
    return p.reshape(B, H, W, kh * kw * C)


def init_params(key):
    """Deterministic synthetic parameters with the same shapes as the module."""
    k = jax.random.split(key, 6)
    return {
        # conv1: Conv2d(1, 10, kernel_size=5)  -> weight [10, 1, 5, 5]
        "w1": jax.random.normal(k[0], (10, 1, 5, 5), jnp.float32) * 0.1,
        "b1": jax.random.normal(k[1], (10,), jnp.float32) * 0.1,
        # conv2: Conv2d(10, 32, kernel_size=5) -> weight [32, 10, 5, 5]
        "w2": jax.random.normal(k[2], (32, 10, 5, 5), jnp.float32) * 0.05,
        "b2": jax.random.normal(k[3], (32,), jnp.float32) * 0.05,
        # out: Linear(32*7*7, 10) -> weight [10, 1568]
        "wo": jax.random.normal(k[4], (10, 32 * 7 * 7), jnp.float32) * 0.02,
        "bo": jax.random.normal(k[5], (10,), jnp.float32) * 0.02,
    }


def mnist_classifier_forward(params, x_nchw):
    """Forward pass matching MNIST_classifier.forward.  x_nchw: [B, 1, 28, 28]."""
    B = x_nchw.shape[0]
    x = jnp.transpose(x_nchw, (0, 2, 3, 1))                      # NCHW -> NHWC

    # --- conv1: Conv2d(1, 10, 5, padding=2) + ReLU + MaxPool2d(2), fused ---
    p1 = im2col(x, 5, 5, 2)                                      # [B, 28, 28, 25]
    w1 = jnp.transpose(params["w1"], (2, 3, 1, 0)).reshape(25, 10)  # (kh,kw,ci,co)
    h1 = conv_relu_pool(p1, w1, params["b1"])                    # [B, 14, 14, 10]

    # --- conv2: Conv2d(10, 32, 5, padding=2) + ReLU + MaxPool2d(2), fused ---
    p2 = im2col(h1, 5, 5, 2)                                     # [B, 14, 14, 250]
    w2 = jnp.transpose(params["w2"], (2, 3, 1, 0)).reshape(250, 32)
    h2 = conv_relu_pool(p2, w2, params["b2"])                    # [B, 7, 7, 32]

    # --- flatten in PyTorch NCHW order, then Linear(1568, 10) ---
    flat = jnp.transpose(h2, (0, 3, 1, 2)).reshape(B, 32 * 7 * 7)
    out = fused_matmul_bias(flat, params["wo"].T, params["bo"], apply_relu=False)
    return out                                                   # [B, 10]


# -----------------------------------------------------------------------------
# Main
# -----------------------------------------------------------------------------
if __name__ == "__main__":
    key = jax.random.PRNGKey(0)
    pkey, xkey = jax.random.split(key)
    params = init_params(pkey)

    # Small deterministic input consistent with the module: MNIST images, batch=2.
    x = jax.random.normal(xkey, (2, 1, 28, 28), jnp.float32)

    logits = jax.jit(mnist_classifier_forward)(params, x)
    logits = jax.block_until_ready(logits)

    assert logits.shape == (2, 10)
    assert bool(jnp.all(jnp.isfinite(logits)))
    print("KERNEL_OK")
</pallas_src>

<mosaic_0001>
module attributes {stable_mosaic.version = 11 : i64} {
  func.func @_conv_relu_pool_kernel(%arg0: i32, %arg1: memref<392x25xf32, #tpu.memory_space<vmem>>, %arg2: memref<392x25xf32, #tpu.memory_space<vmem>>, %arg3: memref<392x25xf32, #tpu.memory_space<vmem>>, %arg4: memref<392x25xf32, #tpu.memory_space<vmem>>, %arg5: memref<25x10xf32, #tpu.memory_space<vmem>>, %arg6: memref<1x10xf32, #tpu.memory_space<vmem>>, %arg7: memref<392x10xf32, #tpu.memory_space<vmem>>) attributes {dimension_semantics = [#tpu.dimension_semantics<arbitrary>], iteration_bounds = array<i64: 1>, scalar_prefetch = 0 : i64, scratch_operands = 0 : i64, tpu.core_type = #tpu.core_type<tc>, window_params = [{pipeline_mode = #tpu.pipeline_mode<synchronous>, transform_indices = @transform_0, window_bounds = array<i64: 392, 25>}, {pipeline_mode = #tpu.pipeline_mode<synchronous>, transform_indices = @transform_1, window_bounds = array<i64: 392, 25>}, {pipeline_mode = #tpu.pipeline_mode<synchronous>, transform_indices = @transform_2, window_bounds = array<i64: 392, 25>}, {pipeline_mode = #tpu.pipeline_mode<synchronous>, transform_indices = @transform_3, window_bounds = array<i64: 392, 25>}, {pipeline_mode = #tpu.pipeline_mode<synchronous>, transform_indices = @transform_4, window_bounds = array<i64: 25, 10>}, {pipeline_mode = #tpu.pipeline_mode<synchronous>, transform_indices = @transform_5, window_bounds = array<i64: 1, 10>}, {pipeline_mode = #tpu.pipeline_mode<synchronous>, transform_indices = @transform_6, window_bounds = array<i64: 392, 10>}]} {
    %c0 = arith.constant 0 : index
    %c0_0 = arith.constant 0 : index
    %0 = vector.load %arg5[%c0, %c0_0] : memref<25x10xf32, #tpu.memory_space<vmem>>, vector<25x10xf32>
    %c0_1 = arith.constant 0 : index
    %c0_2 = arith.constant 0 : index
    %1 = vector.load %arg1[%c0_1, %c0_2] : memref<392x25xf32, #tpu.memory_space<vmem>>, vector<392x25xf32>
    %cst = arith.constant dense<0.000000e+00> : vector<392x10xf32>
    %2 = tpu.matmul %1, %0, %cst {dimension_numbers = #tpu.dot_dimension_numbers<[1], [0], [0], [1], [0, 0, 1, 1], [], []>} : vector<392x25xf32>, vector<25x10xf32>, vector<392x10xf32> -> vector<392x10xf32>
    %c0_3 = arith.constant 0 : index
    %c0_4 = arith.constant 0 : index
    %3 = vector.load %arg2[%c0_3, %c0_4] : memref<392x25xf32, #tpu.memory_space<vmem>>, vector<392x25xf32>
    %cst_5 = arith.constant dense<0.000000e+00> : vector<392x10xf32>
    %4 = tpu.matmul %3, %0, %cst_5 {dimension_numbers = #tpu.dot_dimension_numbers<[1], [0], [0], [1], [0, 0, 1, 1], [], []>} : vector<392x25xf32>, vector<25x10xf32>, vector<392x10xf32> -> vector<392x10xf32>
    %5 = arith.maximumf %2, %4 : vector<392x10xf32>
    %c0_6 = arith.constant 0 : index
    %c0_7 = arith.constant 0 : index
    %6 = vector.load %arg3[%c0_6, %c0_7] : memref<392x25xf32, #tpu.memory_space<vmem>>, vector<392x25xf32>
    %cst_8 = arith.constant dense<0.000000e+00> : vector<392x10xf32>
    %7 = tpu.matmul %6, %0, %cst_8 {dimension_numbers = #tpu.dot_dimension_numbers<[1], [0], [0], [1], [0, 0, 1, 1], [], []>} : vector<392x25xf32>, vector<25x10xf32>, vector<392x10xf32> -> vector<392x10xf32>
    %c0_9 = arith.constant 0 : index
    %c0_10 = arith.constant 0 : index
    %8 = vector.load %arg4[%c0_9, %c0_10] : memref<392x25xf32, #tpu.memory_space<vmem>>, vector<392x25xf32>
    %cst_11 = arith.constant dense<0.000000e+00> : vector<392x10xf32>
    %9 = tpu.matmul %8, %0, %cst_11 {dimension_numbers = #tpu.dot_dimension_numbers<[1], [0], [0], [1], [0, 0, 1, 1], [], []>} : vector<392x25xf32>, vector<25x10xf32>, vector<392x10xf32> -> vector<392x10xf32>
    %10 = arith.maximumf %7, %9 : vector<392x10xf32>
    %11 = arith.maximumf %5, %10 : vector<392x10xf32>
    %c0_12 = arith.constant 0 : index
    %c0_13 = arith.constant 0 : index
    %12 = vector.load %arg6[%c0_12, %c0_13] : memref<1x10xf32, #tpu.memory_space<vmem>>, vector<1x10xf32>
    %13 = vector.broadcast %12 : vector<1x10xf32> to vector<392x10xf32>
    %14 = arith.addf %11, %13 : vector<392x10xf32>
    %cst_14 = arith.constant 0.000000e+00 : f32
    %15 = vector.broadcast %cst_14 : f32 to vector<392x10xf32>
    %16 = arith.maximumf %14, %15 : vector<392x10xf32>
    %c0_15 = arith.constant 0 : index
    %c0_16 = arith.constant 0 : index
    %17 = vector.load %arg7[%c0_15, %c0_16] : memref<392x10xf32, #tpu.memory_space<vmem>>, vector<392x10xf32>
    tpu.vector_store %arg7[%c0_15, %c0_16], %16 {strides = array<i32>} : memref<392x10xf32, #tpu.memory_space<vmem>>, vector<392x10xf32>,
    return
  }
  func.func @transform_0(%arg0: i32) -> (i32, i32) {
    %c0_i32 = arith.constant 0 : i32
    %c0_i32_0 = arith.constant 0 : i32
    %c0_i32_1 = arith.constant 0 : i32
    return %c0_i32, %c0_i32_0 : i32, i32
  }
  func.func @transform_1(%arg0: i32) -> (i32, i32) {
    %c0_i32 = arith.constant 0 : i32
    %c0_i32_0 = arith.constant 0 : i32
    %c0_i32_1 = arith.constant 0 : i32
    return %c0_i32, %c0_i32_0 : i32, i32
  }
  func.func @transform_2(%arg0: i32) -> (i32, i32) {
    %c0_i32 = arith.constant 0 : i32
    %c0_i32_0 = arith.constant 0 : i32
    %c0_i32_1 = arith.constant 0 : i32
    return %c0_i32, %c0_i32_0 : i32, i32
  }
  func.func @transform_3(%arg0: i32) -> (i32, i32) {
    %c0_i32 = arith.constant 0 : i32
    %c0_i32_0 = arith.constant 0 : i32
    %c0_i32_1 = arith.constant 0 : i32
    return %c0_i32, %c0_i32_0 : i32, i32
  }
  func.func @transform_4(%arg0: i32) -> (i32, i32) {
    %c0_i32 = arith.constant 0 : i32
    %c0_i32_0 = arith.constant 0 : i32
    %c0_i32_1 = arith.constant 0 : i32
    return %c0_i32, %c0_i32_0 : i32, i32
  }
  func.func @transform_5(%arg0: i32) -> (i32, i32) {
    %c0_i32 = arith.constant 0 : i32
    %c0_i32_0 = arith.constant 0 : i32
    %c0_i32_1 = arith.constant 0 : i32
    return %c0_i32, %c0_i32_0 : i32, i32
  }
  func.func @transform_6(%arg0: i32) -> (i32, i32) {
    %c0_i32 = arith.constant 0 : i32
    %c0_i32_0 = arith.constant 0 : i32
    %c0_i32_1 = arith.constant 0 : i32
    return %c0_i32, %c0_i32_0 : i32, i32
  }
}

module attributes {stable_mosaic.version = 11 : i64} {
  func.func @_conv_relu_pool_kernel(%arg0: i32, %arg1: memref<98x250xf32, #tpu.memory_space<vmem>>, %arg2: memref<98x250xf32, #tpu.memory_space<vmem>>, %arg3: memref<98x250xf32, #tpu.memory_space<vmem>>, %arg4: memref<98x250xf32, #tpu.memory_space<vmem>>, %arg5: memref<250x32xf32, #tpu.memory_space<vmem>>, %arg6: memref<1x32xf32, #tpu.memory_space<vmem>>, %arg7: memref<98x32xf32, #tpu.memory_space<vmem>>) attributes {dimension_semantics = [#tpu.dimension_semantics<arbitrary>], iteration_bounds = array<i64: 1>, scalar_prefetch = 0 : i64, scratch_operands = 0 : i64, tpu.core_type = #tpu.core_type<tc>, window_params = [{pipeline_mode = #tpu.pipeline_mode<synchronous>, transform_indices = @transform_0, window_bounds = array<i64: 98, 250>}, {pipeline_mode = #tpu.pipeline_mode<synchronous>, transform_indices = @transform_1, window_bounds = array<i64: 98, 250>}, {pipeline_mode = #tpu.pipeline_mode<synchronous>, transform_indices = @transform_2, window_bounds = array<i64: 98, 250>}, {pipeline_mode = #tpu.pipeline_mode<synchronous>, transform_indices = @transform_3, window_bounds = array<i64: 98, 250>}, {pipeline_mode = #tpu.pipeline_mode<synchronous>, transform_indices = @transform_4, window_bounds = array<i64: 250, 32>}, {pipeline_mode = #tpu.pipeline_mode<synchronous>, transform_indices = @transform_5, window_bounds = array<i64: 1, 32>}, {pipeline_mode = #tpu.pipeline_mode<synchronous>, transform_indices = @transform_6, window_bounds = array<i64: 98, 32>}]} {
    %c0 = arith.constant 0 : index
    %c0_0 = arith.constant 0 : index
    %0 = vector.load %arg5[%c0, %c0_0] : memref<250x32xf32, #tpu.memory_space<vmem>>, vector<250x32xf32>
    %c0_1 = arith.constant 0 : index
    %c0_2 = arith.constant 0 : index
    %1 = vector.load %arg1[%c0_1, %c0_2] : memref<98x250xf32, #tpu.memory_space<vmem>>, vector<98x250xf32>
    %cst = arith.constant dense<0.000000e+00> : vector<98x32xf32>
    %2 = tpu.matmul %1, %0, %cst {dimension_numbers = #tpu.dot_dimension_numbers<[1], [0], [0], [1], [0, 0, 1, 1], [], []>} : vector<98x250xf32>, vector<250x32xf32>, vector<98x32xf32> -> vector<98x32xf32>
    %c0_3 = arith.constant 0 : index
    %c0_4 = arith.constant 0 : index
    %3 = vector.load %arg2[%c0_3, %c0_4] : memref<98x250xf32, #tpu.memory_space<vmem>>, vector<98x250xf32>
    %cst_5 = arith.constant dense<0.000000e+00> : vector<98x32xf32>
    %4 = tpu.matmul %3, %0, %cst_5 {dimension_numbers = #tpu.dot_dimension_numbers<[1], [0], [0], [1], [0, 0, 1, 1], [], []>} : vector<98x250xf32>, vector<250x32xf32>, vector<98x32xf32> -> vector<98x32xf32>
    %5 = arith.maximumf %2, %4 : vector<98x32xf32>
    %c0_6 = arith.constant 0 : index
    %c0_7 = arith.constant 0 : index
    %6 = vector.load %arg3[%c0_6, %c0_7] : memref<98x250xf32, #tpu.memory_space<vmem>>, vector<98x250xf32>
    %cst_8 = arith.constant dense<0.000000e+00> : vector<98x32xf32>
    %7 = tpu.matmul %6, %0, %cst_8 {dimension_numbers = #tpu.dot_dimension_numbers<[1], [0], [0], [1], [0, 0, 1, 1], [], []>} : vector<98x250xf32>, vector<250x32xf32>, vector<98x32xf32> -> vector<98x32xf32>
    %c0_9 = arith.constant 0 : index
    %c0_10 = arith.constant 0 : index
    %8 = vector.load %arg4[%c0_9, %c0_10] : memref<98x250xf32, #tpu.memory_space<vmem>>, vector<98x250xf32>
    %cst_11 = arith.constant dense<0.000000e+00> : vector<98x32xf32>
    %9 = tpu.matmul %8, %0, %cst_11 {dimension_numbers = #tpu.dot_dimension_numbers<[1], [0], [0], [1], [0, 0, 1, 1], [], []>} : vector<98x250xf32>, vector<250x32xf32>, vector<98x32xf32> -> vector<98x32xf32>
    %10 = arith.maximumf %7, %9 : vector<98x32xf32>
    %11 = arith.maximumf %5, %10 : vector<98x32xf32>
    %c0_12 = arith.constant 0 : index
    %c0_13 = arith.constant 0 : index
    %12 = vector.load %arg6[%c0_12, %c0_13] : memref<1x32xf32, #tpu.memory_space<vmem>>, vector<1x32xf32>
    %13 = vector.broadcast %12 : vector<1x32xf32> to vector<98x32xf32>
    %14 = arith.addf %11, %13 : vector<98x32xf32>
    %cst_14 = arith.constant 0.000000e+00 : f32
    %15 = vector.broadcast %cst_14 : f32 to vector<98x32xf32>
    %16 = arith.maximumf %14, %15 : vector<98x32xf32>
    %c0_15 = arith.constant 0 : index
    %c0_16 = arith.constant 0 : index
    %17 = vector.load %arg7[%c0_15, %c0_16] : memref<98x32xf32, #tpu.memory_space<vmem>>, vector<98x32xf32>
    tpu.vector_store %arg7[%c0_15, %c0_16], %16 {strides = array<i32>} : memref<98x32xf32, #tpu.memory_space<vmem>>, vector<98x32xf32>,
    return
  }
  func.func @transform_0(%arg0: i32) -> (i32, i32) {
    %c0_i32 = arith.constant 0 : i32
    %c0_i32_0 = arith.constant 0 : i32
    %c0_i32_1 = arith.constant 0 : i32
    return %c0_i32, %c0_i32_0 : i32, i32
  }
  func.func @transform_1(%arg0: i32) -> (i32, i32) {
    %c0_i32 = arith.constant 0 : i32
    %c0_i32_0 = arith.constant 0 : i32
    %c0_i32_1 = arith.constant 0 : i32
    return %c0_i32, %c0_i32_0 : i32, i32
  }
  func.func @transform_2(%arg0: i32) -> (i32, i32) {
    %c0_i32 = arith.constant 0 : i32
    %c0_i32_0 = arith.constant 0 : i32
    %c0_i32_1 = arith.constant 0 : i32
    return %c0_i32, %c0_i32_0 : i32, i32
  }
  func.func @transform_3(%arg0: i32) -> (i32, i32) {
    %c0_i32 = arith.constant 0 : i32
    %c0_i32_0 = arith.constant 0 : i32
    %c0_i32_1 = arith.constant 0 : i32
    return %c0_i32, %c0_i32_0 : i32, i32
  }
  func.func @transform_4(%arg0: i32) -> (i32, i32) {
    %c0_i32 = arith.constant 0 : i32
    %c0_i32_0 = arith.constant 0 : i32
    %c0_i32_1 = arith.constant 0 : i32
    return %c0_i32, %c0_i32_0 : i32, i32
  }
  func.func @transform_5(%arg0: i32) -> (i32, i32) {
    %c0_i32 = arith.constant 0 : i32
    %c0_i32_0 = arith.constant 0 : i32
    %c0_i32_1 = arith.constant 0 : i32
    return %c0_i32, %c0_i32_0 : i32, i32
  }
  func.func @transform_6(%arg0: i32) -> (i32, i32) {
    %c0_i32 = arith.constant 0 : i32
    %c0_i32_0 = arith.constant 0 : i32
    %c0_i32_1 = arith.constant 0 : i32
    return %c0_i32, %c0_i32_0 : i32, i32
  }
}

module attributes {stable_mosaic.version = 11 : i64} {
  func.func @_matmul_bias_kernel(%arg0: i32, %arg1: memref<2x1568xf32, #tpu.memory_space<vmem>>, %arg2: memref<1568x10xf32, #tpu.memory_space<vmem>>, %arg3: memref<1x10xf32, #tpu.memory_space<vmem>>, %arg4: memref<2x10xf32, #tpu.memory_space<vmem>>) attributes {dimension_semantics = [#tpu.dimension_semantics<arbitrary>], iteration_bounds = array<i64: 1>, scalar_prefetch = 0 : i64, scratch_operands = 0 : i64, tpu.core_type = #tpu.core_type<tc>, window_params = [{pipeline_mode = #tpu.pipeline_mode<synchronous>, transform_indices = @transform_0, window_bounds = array<i64: 2, 1568>}, {pipeline_mode = #tpu.pipeline_mode<synchronous>, transform_indices = @transform_1, window_bounds = array<i64: 1568, 10>}, {pipeline_mode = #tpu.pipeline_mode<synchronous>, transform_indices = @transform_2, window_bounds = array<i64: 1, 10>}, {pipeline_mode = #tpu.pipeline_mode<synchronous>, transform_indices = @transform_3, window_bounds = array<i64: 2, 10>}]} {
    %c0 = arith.constant 0 : index
    %c0_0 = arith.constant 0 : index
    %0 = vector.load %arg1[%c0, %c0_0] : memref<2x1568xf32, #tpu.memory_space<vmem>>, vector<2x1568xf32>
    %c0_1 = arith.constant 0 : index
    %c0_2 = arith.constant 0 : index
    %1 = vector.load %arg2[%c0_1, %c0_2] : memref<1568x10xf32, #tpu.memory_space<vmem>>, vector<1568x10xf32>
    %cst = arith.constant dense<0.000000e+00> : vector<2x10xf32>
    %2 = tpu.matmul %0, %1, %cst {dimension_numbers = #tpu.dot_dimension_numbers<[1], [0], [0], [1], [0, 0, 1, 1], [], []>} : vector<2x1568xf32>, vector<1568x10xf32>, vector<2x10xf32> -> vector<2x10xf32>
    %c0_3 = arith.constant 0 : index
    %c0_4 = arith.constant 0 : index
    %3 = vector.load %arg3[%c0_3, %c0_4] : memref<1x10xf32, #tpu.memory_space<vmem>>, vector<1x10xf32>
    %4 = vector.broadcast %3 : vector<1x10xf32> to vector<2x10xf32>
    %5 = arith.addf %2, %4 : vector<2x10xf32>
    %c0_5 = arith.constant 0 : index
    %c0_6 = arith.constant 0 : index
    %6 = vector.load %arg4[%c0_5, %c0_6] : memref<2x10xf32, #tpu.memory_space<vmem>>, vector<2x10xf32>
    tpu.vector_store %arg4[%c0_5, %c0_6], %5 {strides = array<i32>} : memref<2x10xf32, #tpu.memory_space<vmem>>, vector<2x10xf32>,
    return
  }
  func.func @transform_0(%arg0: i32) -> (i32, i32) {
    %c0_i32 = arith.constant 0 : i32
    %c0_i32_0 = arith.constant 0 : i32
    %c0_i32_1 = arith.constant 0 : i32
    return %c0_i32, %c0_i32_0 : i32, i32
  }
  func.func @transform_1(%arg0: i32) -> (i32, i32) {
    %c0_i32 = arith.constant 0 : i32
    %c0_i32_0 = arith.constant 0 : i32
    %c0_i32_1 = arith.constant 0 : i32
    return %c0_i32, %c0_i32_0 : i32, i32
  }
  func.func @transform_2(%arg0: i32) -> (i32, i32) {
    %c0_i32 = arith.constant 0 : i32
    %c0_i32_0 = arith.constant 0 : i32
    %c0_i32_1 = arith.constant 0 : i32
    return %c0_i32, %c0_i32_0 : i32, i32
  }
  func.func @transform_3(%arg0: i32) -> (i32, i32) {
    %c0_i32 = arith.constant 0 : i32
    %c0_i32_0 = arith.constant 0 : i32
    %c0_i32_1 = arith.constant 0 : i32
    return %c0_i32, %c0_i32_0 : i32, i32
  }
}

</mosaic_0001>

<llo_original>
// kernel: mnist_classifier_forward.3
$region0: #{mnist_classifier_forward.3}
  #allocation0 [shape = 'u32[]', space=smem, size = 0x4, offset = 0x4, fixed_abs, tag = 'smem constant byte address 0x4 - core index']
  #allocation1 [shape = 'u32[72,128]{1,0:T(1,128)}', space=vmem, size = 0x9000, scoped, tag = 'internal scratch']
  %s0 = inlined_call_operand.vmem [shape: f32[392,25], index: 0, kind: input, shape index: {}]
  %s1 = inlined_call_operand.vmem [shape: f32[392,25], index: 1, kind: input, shape index: {}]
  %s2 = inlined_call_operand.vmem [shape: f32[392,25], index: 2, kind: input, shape index: {}]
  %s3 = inlined_call_operand.vmem [shape: f32[392,25], index: 3, kind: input, shape index: {}]
  %s4 = inlined_call_operand.vmem [shape: f32[25,10], index: 4, kind: input, shape index: {}]
  %s5 = inlined_call_operand.vmem [shape: f32[1,10], index: 5, kind: input, shape index: {}]
  %s6 = inlined_call_operand.vmem [shape: f32[392,10], index: 6, kind: output, shape index: {}]
  %s7 = sld [smem:[#allocation0]]
  $region34: #{mnist_classifier_forward.3} parent=0
    _
  %s9 = ssub.s32 1, %s7
  %s10 = scalar_select 0, %s9, %s7
  // Predicated region
  $region2: #{mnist_classifier_forward.3} parent=0 // pred_check
    _
  $region3: #{mnist_classifier_forward.3} parent=0 // pred_check_branch
    %12 = sbr.rel (0) target = $region5
  $region4: #{mnist_classifier_forward.3} parent=0 // pred_region
    _
  $region5: #{mnist_classifier_forward.3} parent=0 // pred_fallthru
    _
  // Predicated region
  $region6: #{mnist_classifier_forward.3} parent=0 // pred_check
    _
  $region7: #{mnist_classifier_forward.3} parent=0 // pred_check_branch
    %14 = sbr.rel (0) target = $region9
  $region8: #{mnist_classifier_forward.3} parent=0 // pred_region
    _
  $region9: #{mnist_classifier_forward.3} parent=0 // pred_fallthru
    _
  // Predicated region
  $region10: #{mnist_classifier_forward.3} parent=0 // pred_check
    _
  $region11: #{mnist_classifier_forward.3} parent=0 // pred_check_branch
    %16 = sbr.rel (0) target = $region13
  $region12: #{mnist_classifier_forward.3} parent=0 // pred_region
    _
  $region13: #{mnist_classifier_forward.3} parent=0 // pred_fallthru
    _
  // Predicated region
  $region14: #{mnist_classifier_forward.3} parent=0 // pred_check
    _
  $region15: #{mnist_classifier_forward.3} parent=0 // pred_check_branch
    %18 = sbr.rel (0) target = $region17
  $region16: #{mnist_classifier_forward.3} parent=0 // pred_region
    _
  $region17: #{mnist_classifier_forward.3} parent=0 // pred_fallthru
    _
  // Predicated region
  $region18: #{mnist_classifier_forward.3} parent=0 // pred_check
    _
  $region19: #{mnist_classifier_forward.3} parent=0 // pred_check_branch
    %20 = sbr.rel (0) target = $region21
  $region20: #{mnist_classifier_forward.3} parent=0 // pred_region
    _
  $region21: #{mnist_classifier_forward.3} parent=0 // pred_fallthru
    _
  // Predicated region
  $region22: #{mnist_classifier_forward.3} parent=0 // pred_check
    _
  $region23: #{mnist_classifier_forward.3} parent=0 // pred_check_branch
    %22 = sbr.rel (0) target = $region25
  $region24: #{mnist_classifier_forward.3} parent=0 // pred_region
    _
  $region25: #{mnist_classifier_forward.3} parent=0 // pred_fallthru
    _
  %v23 = vld [vmem:[%s4] sm:$0xff]
  %v24 = vld [vmem:[%s4 + $0x8] sm:$0xff]
  %v25 = vld [vmem:[%s4 + $0x10] sm:$0xff]
  %v26 = vld [vmem:[%s4 + $0x18] sm:$0x1]
  %v27 = vld [vmem:[%s0] sm:$0xff]
  %v28 = vld [vmem:[%s0 + $0x8] sm:$0xff]
  %v29 = vld [vmem:[%s0 + $0x10] sm:$0xff]
  %v30 = vld [vmem:[%s0 + $0x18] sm:$0xff]
  %v31 = vld [vmem:[%s0 + $0x20] sm:$0xff]
  %v32 = vld [vmem:[%s0 + $0x28] sm:$0xff]
  %v33 = vld [vmem:[%s0 + $0x30] sm:$0xff]
  %v34 = vld [vmem:[%s0 + $0x38] sm:$0xff]
  %v35 = vld [vmem:[%s0 + $0x40] sm:$0xff]
  %v36 = vld [vmem:[%s0 + $0x48] sm:$0xff]
  %v37 = vld [vmem:[%s0 + $0x50] sm:$0xff]
  %v38 = vld [vmem:[%s0 + $0x58] sm:$0xff]
  %v39 = vld [vmem:[%s0 + $0x60] sm:$0xff]
  %v40 = vld [vmem:[%s0 + $0x68] sm:$0xff]
  %v41 = vld [vmem:[%s0 + $0x70] sm:$0xff]
  %v42 = vld [vmem:[%s0 + $0x78] sm:$0xff]
  %v43 = vld [vmem:[%s0 + $0x80] sm:$0xff]
  %v44 = vld [vmem:[%s0 + $0x88] sm:$0xff]
  %v45 = vld [vmem:[%s0 + $0x90] sm:$0xff]
  %v46 = vld [vmem:[%s0 + $0x98] sm:$0xff]
  %v47 = vld [vmem:[%s0 + $0xa0] sm:$0xff]
  %v48 = vld [vmem:[%s0 + $0xa8] sm:$0xff]
  %v49 = vld [vmem:[%s0 + $0xb0] sm:$0xff]
  %v50 = vld [vmem:[%s0 + $0xb8] sm:$0xff]
  %v51 = vld [vmem:[%s0 + $0xc0] sm:$0xff]
  %v52 = vld [vmem:[%s0 + $0xc8] sm:$0xff]
  %v53 = vld [vmem:[%s0 + $0xd0] sm:$0xff]
  %v54 = vld [vmem:[%s0 + $0xd8] sm:$0xff]
  %v55 = vld [vmem:[%s0 + $0xe0] sm:$0xff]
  %v56 = vld [vmem:[%s0 + $0xe8] sm:$0xff]
  %v57 = vld [vmem:[%s0 + $0xf0] sm:$0xff]
  %v58 = vld [vmem:[%s0 + $0xf8] sm:$0xff]
  %v59 = vld [vmem:[%s0 + $0x100] sm:$0xff]
  %v60 = vld [vmem:[%s0 + $0x108] sm:$0xff]
  %v61 = vld [vmem:[%s0 + $0x110] sm:$0xff]
  %v62 = vld [vmem:[%s0 + $0x118] sm:$0xff]
  %v63 = vld [vmem:[%s0 + $0x120] sm:$0xff]
  %v64 = vld [vmem:[%s0 + $0x128] sm:$0xff]
  %v65 = vld [vmem:[%s0 + $0x130] sm:$0xff]
  %v66 = vld [vmem:[%s0 + $0x138] sm:$0xff]
  %v67 = vld [vmem:[%s0 + $0x140] sm:$0xff]
  %v68 = vld [vmem:[%s0 + $0x148] sm:$0xff]
  %v69 = vld [vmem:[%s0 + $0x150] sm:$0xff]
  %v70 = vld [vmem:[%s0 + $0x158] sm:$0xff]
  %v71 = vld [vmem:[%s0 + $0x160] sm:$0xff]
  %v72 = vld [vmem:[%s0 + $0x168] sm:$0xff]
  %v73 = vld [vmem:[%s0 + $0x170] sm:$0xff]
  %v74 = vld [vmem:[%s0 + $0x178] sm:$0xff]
  %v75 = vld [vmem:[%s0 + $0x180] sm:$0xff]
  %vm76 = vcmask 203776
  %v78 = vsel %vm76, %v27, 0
  %v81 = vsel %vm76, %v28, 0
  %v84 = vsel %vm76, %v29, 0
  %v87 = vsel %vm76, %v30, 0
  %v90 = vsel %vm76, %v31, 0
  %v93 = vsel %vm76, %v32, 0
  %v96 = vsel %vm76, %v33, 0
  %v99 = vsel %vm76, %v34, 0
  %v102 = vsel %vm76, %v35, 0
  %v105 = vsel %vm76, %v36, 0
  %v108 = vsel %vm76, %v37, 0
  %v111 = vsel %vm76, %v38, 0
  %v114 = vsel %vm76, %v39, 0
  %v117 = vsel %vm76, %v40, 0
  %v120 = vsel %vm76, %v41, 0
  %v123 = vsel %vm76, %v42, 0
  %v126 = vsel %vm76, %v43, 0
  %v129 = vsel %vm76, %v44, 0
  %v132 = vsel %vm76, %v45, 0
  %v135 = vsel %vm76, %v46, 0
  %v138 = vsel %vm76, %v47, 0
  %v141 = vsel %vm76, %v48, 0
  %v144 = vsel %vm76, %v49, 0
  %v147 = vsel %vm76, %v50, 0
  %v150 = vsel %vm76, %v51, 0
  %v153 = vsel %vm76, %v52, 0
  %v156 = vsel %vm76, %v53, 0
  %v159 = vsel %vm76, %v54, 0
  %v162 = vsel %vm76, %v55, 0
  %v165 = vsel %vm76, %v56, 0
  %v168 = vsel %vm76, %v57, 0
  %v171 = vsel %vm76, %v58, 0
  %v174 = vsel %vm76, %v59, 0
  %v177 = vsel %vm76, %v60, 0
  %v180 = vsel %vm76, %v61, 0
  %v183 = vsel %vm76, %v62, 0
  %v186 = vsel %vm76, %v63, 0
  %v189 = vsel %vm76, %v64, 0
  %v192 = vsel %vm76, %v65, 0
  %v195 = vsel %vm76, %v66, 0
  %v198 = vsel %vm76, %v67, 0
  %v201 = vsel %vm76, %v68, 0
  %v204 = vsel %vm76, %v69, 0
  %v207 = vsel %vm76, %v70, 0
  %v210 = vsel %vm76, %v71, 0
  %v213 = vsel %vm76, %v72, 0
  %v216 = vsel %vm76, %v73, 0
  %v219 = vsel %vm76, %v74, 0
  %v222 = vsel %vm76, %v75, 0
  %vm224 = vcmask 1040384
  %v226 = vsel %vm224, %v26, 0
  %228 = vmatpush.msra.mxu0 0.0
  %229 = vmatpush.msra.mxu0 0.0
  %230 = vmatpush.msra.mxu0 0.0
  %231 = vmatpush.msra.mxu0 0.0
  %232 = vmatpush.msra.mxu0 0.0
  %233 = vmatpush.msra.mxu0 0.0
  %234 = vmatpush.msra.mxu0 0.0
  %235 = vmatpush.msra.mxu0 0.0
  %236 = vmatpush.msra.mxu0 0.0
  %237 = vmatpush.msra.mxu0 0.0
  %238 = vmatpush.msra.mxu0 0.0
  %239 = vmatpush.msra.mxu0 0.0
  %240 = vmatpush.msra.mxu0 %v226
  %241 = vmatpush.msra.mxu0 %v25
  %242 = vmatpush.msra.mxu0 %v24
  %243 = vmatpush.msra.mxu0 %v23
  %244 = vmatmul.f32.gmra.mxu0 %v78
  %v245 = vpop.f32.mrf.mxu0
  %v246 = vadd.f32 0.0, %v245
  %247 = vmatmul.f32.gmra.mxu0 %v81
  %v248 = vpop.f32.mrf.mxu0
  %v249 = vadd.f32 0.0, %v248
  %250 = vmatmul.f32.gmra.mxu0 %v84
  %v251 = vpop.f32.mrf.mxu0
  %v252 = vadd.f32 0.0, %v251
  %253 = vmatmul.f32.gmra.mxu0 %v87
  %v254 = vpop.f32.mrf.mxu0
  %v255 = vadd.f32 0.0, %v254
  %256 = vmatmul.f32.gmra.mxu0 %v90
  %v257 = vpop.f32.mrf.mxu0
  %v258 = vadd.f32 0.0, %v257
  %259 = vmatmul.f32.gmra.mxu0 %v93
  %v260 = vpop.f32.mrf.mxu0
  %v261 = vadd.f32 0.0, %v260
  %262 = vmatmul.f32.gmra.mxu0 %v96
  %v263 = vpop.f32.mrf.mxu0
  %v264 = vadd.f32 0.0, %v263
  %265 = vmatmul.f32.gmra.mxu0 %v99
  %v266 = vpop.f32.mrf.mxu0
  %v267 = vadd.f32 0.0, %v266
  %268 = vmatmul.f32.gmra.mxu0 %v102
  %v269 = vpop.f32.mrf.mxu0
  %v270 = vadd.f32 0.0, %v269
  %271 = vmatmul.f32.gmra.mxu0 %v105
  %v272 = vpop.f32.mrf.mxu0
  %v273 = vadd.f32 0.0, %v272
  %274 = vmatmul.f32.gmra.mxu0 %v108
  %v275 = vpop.f32.mrf.mxu0
  %v276 = vadd.f32 0.0, %v275
  %277 = vmatmul.f32.gmra.mxu0 %v111
  %v278 = vpop.f32.mrf.mxu0
  %v279 = vadd.f32 0.0, %v278
  %280 = vmatmul.f32.gmra.mxu0 %v114
  %v281 = vpop.f32.mrf.mxu0
  %v282 = vadd.f32 0.0, %v281
  %283 = vmatmul.f32.gmra.mxu0 %v117
  %v284 = vpop.f32.mrf.mxu0
  %v285 = vadd.f32 0.0, %v284
  %286 = vmatmul.f32.gmra.mxu0 %v120
  %v287 = vpop.f32.mrf.mxu0
  %v288 = vadd.f32 0.0, %v287
  %289 = vmatmul.f32.gmra.mxu0 %v123
  %v290 = vpop.f32.mrf.mxu0
  %v291 = vadd.f32 0.0, %v290
  %292 = vmatmul.f32.gmra.mxu0 %v126
  %v293 = vpop.f32.mrf.mxu0
  %v294 = vadd.f32 0.0, %v293
  %295 = vmatmul.f32.gmra.mxu0 %v129
  %v296 = vpop.f32.mrf.mxu0
  %v297 = vadd.f32 0.0, %v296
  %298 = vmatmul.f32.gmra.mxu0 %v132
  %v299 = vpop.f32.mrf.mxu0
  %v300 = vadd.f32 0.0, %v299
  %301 = vmatmul.f32.gmra.mxu0 %v135
  %v302 = vpop.f32.mrf.mxu0
  %v303 = vadd.f32 0.0, %v302
  %304 = vmatmul.f32.gmra.mxu0 %v138
  %v305 = vpop.f32.mrf.mxu0
  %v306 = vadd.f32 0.0, %v305
  %307 = vmatmul.f32.gmra.mxu0 %v141
  %v308 = vpop.f32.mrf.mxu0
  %v309 = vadd.f32 0.0, %v308
  %310 = vmatmul.f32.gmra.mxu0 %v144
  %v311 = vpop.f32.mrf.mxu0
  %v312 = vadd.f32 0.0, %v311
  %313 = vmatmul.f32.gmra.mxu0 %v147
  %v314 = vpop.f32.mrf.mxu0
  %v315 = vadd.f32 0.0, %v314
  %316 = vmatmul.f32.gmra.mxu0 %v150
  %v317 = vpop.f32.mrf.mxu0
  %v318 = vadd.f32 0.0, %v317
  %319 = vmatmul.f32.gmra.mxu0 %v153
  %v320 = vpop.f32.mrf.mxu0
  %v321 = vadd.f32 0.0, %v320
  %322 = vmatmul.f32.gmra.mxu0 %v156
  %v323 = vpop.f32.mrf.mxu0
  %v324 = vadd.f32 0.0, %v323
  %325 = vmatmul.f32.gmra.mxu0 %v159
  %v326 = vpop.f32.mrf.mxu0
  %v327 = vadd.f32 0.0, %v326
  %328 = vmatmul.f32.gmra.mxu0 %v162
  %v329 = vpop.f32.mrf.mxu0
  %v330 = vadd.f32 0.0, %v329
  %331 = vmatmul.f32.gmra.mxu0 %v165
  %v332 = vpop.f32.mrf.mxu0
  %v333 = vadd.f32 0.0, %v332
  %334 = vmatmul.f32.gmra.mxu0 %v168
  %v335 = vpop.f32.mrf.mxu0
  %v336 = vadd.f32 0.0, %v335
  %337 = vmatmul.f32.gmra.mxu0 %v171
  %v338 = vpop.f32.mrf.mxu0
  %v339 = vadd.f32 0.0, %v338
  %340 = vmatmul.f32.gmra.mxu0 %v174
  %v341 = vpop.f32.mrf.mxu0
  %v342 = vadd.f32 0.0, %v341
  %343 = vmatmul.f32.gmra.mxu0 %v177
  %v344 = vpop.f32.mrf.mxu0
  %v345 = vadd.f32 0.0, %v344
  %346 = vmatmul.f32.gmra.mxu0 %v180
  %v347 = vpop.f32.mrf.mxu0
  %v348 = vadd.f32 0.0, %v347
  %349 = vmatmul.f32.gmra.mxu0 %v183
  %v350 = vpop.f32.mrf.mxu0
  %v351 = vadd.f32 0.0, %v350
  %352 = vmatmul.f32.gmra.mxu0 %v186
  %v353 = vpop.f32.mrf.mxu0
  %v354 = vadd.f32 0.0, %v353
  %355 = vmatmul.f32.gmra.mxu0 %v189
  %v356 = vpop.f32.mrf.mxu0
  %v357 = vadd.f32 0.0, %v356
  %358 = vmatmul.f32.gmra.mxu0 %v192
  %v359 = vpop.f32.mrf.mxu0
  %v360 = vadd.f32 0.0, %v359
  %361 = vmatmul.f32.gmra.mxu0 %v195
  %v362 = vpop.f32.mrf.mxu0
  %v363 = vadd.f32 0.0, %v362
  %364 = vmatmul.f32.gmra.mxu0 %v198
  %v365 = vpop.f32.mrf.mxu0
  %v366 = vadd.f32 0.0, %v365
  %367 = vmatmul.f32.gmra.mxu0 %v201
  %v368 = vpop.f32.mrf.mxu0
  %v369 = vadd.f32 0.0, %v368
  %370 = vmatmul.f32.gmra.mxu0 %v204
  %v371 = vpop.f32.mrf.mxu0
  %v372 = vadd.f32 0.0, %v371
  %373 = vmatmul.f32.gmra.mxu0 %v207
  %v374 = vpop.f32.mrf.mxu0
  %v375 = vadd.f32 0.0, %v374
  %376 = vmatmul.f32.gmra.mxu0 %v210
  %v377 = vpop.f32.mrf.mxu0
  %v378 = vadd.f32 0.0, %v377
  %379 = vmatmul.f32.gmra.mxu0 %v213
  %v380 = vpop.f32.mrf.mxu0
  %v381 = vadd.f32 0.0, %v380
  %382 = vmatmul.f32.gmra.mxu0 %v216
  %v383 = vpop.f32.mrf.mxu0
  %v384 = vadd.f32 0.0, %v383
  %385 = vmatmul.f32.gmra.mxu0 %v219
  %v386 = vpop.f32.mrf.mxu0
  %v387 = vadd.f32 0.0, %v386
  %388 = vmatmul.f32.gmra.mxu0 %v222
  %v389 = vpop.f32.mrf.mxu0
  %v390 = vadd.f32 0.0, %v389
  %391 = vdwg.mxu0
  %v392 = vld [vmem:[%s1] sm:$0xff]
  %v393 = vld [vmem:[%s1 + $0x8] sm:$0xff]
  %v394 = vld [vmem:[%s1 + $0x10] sm:$0xff]
  %v395 = vld [vmem:[%s1 + $0x18] sm:$0xff]
  %v396 = vld [vmem:[%s1 + $0x20] sm:$0xff]
  %v397 = vld [vmem:[%s1 + $0x28] sm:$0xff]
  %v398 = vld [vmem:[%s1 + $0x30] sm:$0xff]
  %v399 = vld [vmem:[%s1 + $0x38] sm:$0xff]
  %v400 = vld [vmem:[%s1 + $0x40] sm:$0xff]
  %v401 = vld [vmem:[%s1 + $0x48] sm:$0xff]
  %v402 = vld [vmem:[%s1 + $0x50] sm:$0xff]
  %v403 = vld [vmem:[%s1 + $0x58] sm:$0xff]
  %v404 = vld [vmem:[%s1 + $0x60] sm:$0xff]
  %v405 = vld [vmem:[%s1 + $0x68] sm:$0xff]
  %v406 = vld [vmem:[%s1 + $0x70] sm:$0xff]
  %v407 = vld [vmem:[%s1 + $0x78] sm:$0xff]
  %v408 = vld [vmem:[%s1 + $0x80] sm:$0xff]
  %v409 = vld [vmem:[%s1 + $0x88] sm:$0xff]
  %v410 = vld [vmem:[%s1 + $0x90] sm:$0xff]
  %v411 = vld [vmem:[%s1 + $0x98] sm:$0xff]
  %v412 = vld [vmem:[%s1 + $0xa0] sm:$0xff]
  %v413 = vld [vmem:[%s1 + $0xa8] sm:$0xff]
  %v414 = vld [vmem:[%s1 + $0xb0] sm:$0xff]
  %v415 = vld [vmem:[%s1 + $0xb8] sm:$0xff]
  %v416 = vld [vmem:[%s1 + $0xc0] sm:$0xff]
  %v417 = vld [vmem:[%s1 + $0xc8] sm:$0xff]
  %v418 = vld [vmem:[%s1 + $0xd0] sm:$0xff]
  %v419 = vld [vmem:[%s1 + $0xd8] sm:$0xff]
  %v420 = vld [vmem:[%s1 + $0xe0] sm:$0xff]
  %v421 = vld [vmem:[%s1 + $0xe8] sm:$0xff]
  %v422 = vld [vmem:[%s1 + $0xf0] sm:$0xff]
  %v423 = vld [vmem:[%s1 + $0xf8] sm:$0xff]
  %v424 = vld [vmem:[%s1 + $0x100] sm:$0xff]
  %v425 = vld [vmem:[%s1 + $0x108] sm:$0xff]
  %v426 = vld [vmem:[%s1 + $0x110] sm:$0xff]
  %v427 = vld [vmem:[%s1 + $0x118] sm:$0xff]
  %v428 = vld [vmem:[%s1 + $0x120] sm:$0xff]
  %v429 = vld [vmem:[%s1 + $0x128] sm:$0xff]
  %v430 = vld [vmem:[%s1 + $0x130] sm:$0xff]
  %v431 = vld [vmem:[%s1 + $0x138] sm:$0xff]
  %v432 = vld [vmem:[%s1 + $0x140] sm:$0xff]
  %v433 = vld [vmem:[%s1 + $0x148] sm:$0xff]
  %v434 = vld [vmem:[%s1 + $0x150] sm:$0xff]
  %v435 = vld [vmem:[%s1 + $0x158] sm:$0xff]
  %v436 = vld [vmem:[%s1 + $0x160] sm:$0xff]
  %v437 = vld [vmem:[%s1 + $0x168] sm:$0xff]
  %v438 = vld [vmem:[%s1 + $0x170] sm:$0xff]
  %v439 = vld [vmem:[%s1 + $0x178] sm:$0xff]
  %v440 = vld [vmem:[%s1 + $0x180] sm:$0xff]
  %v442 = vsel %vm76, %v392, 0
  %v445 = vsel %vm76, %v393, 0
  %v448 = vsel %vm76, %v394, 0
  %v451 = vsel %vm76, %v395, 0
  %v454 = vsel %vm76, %v396, 0
  %v457 = vsel %vm76, %v397, 0
  %v460 = vsel %vm76, %v398, 0
  %v463 = vsel %vm76, %v399, 0
  %v466 = vsel %vm76, %v400, 0
  %v469 = vsel %vm76, %v401, 0
  %v472 = vsel %vm76, %v402, 0
  %v475 = vsel %vm76, %v403, 0
  %v478 = vsel %vm76, %v404, 0
  %v481 = vsel %vm76, %v405, 0
  %v484 = vsel %vm76, %v406, 0
  %v487 = vsel %vm76, %v407, 0
  %v490 = vsel %vm76, %v408, 0
  %v493 = vsel %vm76, %v409, 0
  %v496 = vsel %vm76, %v410, 0
  %v499 = vsel %vm76, %v411, 0
  %v502 = vsel %vm76, %v412, 0
  %v505 = vsel %vm76, %v413, 0
  %v508 = vsel %vm76, %v414, 0
  %v511 = vsel %vm76, %v415, 0
  %v514 = vsel %vm76, %v416, 0
  %v517 = vsel %vm76, %v417, 0
  %v520 = vsel %vm76, %v418, 0
  %v523 = vsel %vm76, %v419, 0
  %v526 = vsel %vm76, %v420, 0
  %v529 = vsel %vm76, %v421, 0
  %v532 = vsel %vm76, %v422, 0
  %v535 = vsel %vm76, %v423, 0
  %v538 = vsel %vm76, %v424, 0
  %v541 = vsel %vm76, %v425, 0
  %v544 = vsel %vm76, %v426, 0
  %v547 = vsel %vm76, %v427, 0
  %v550 = vsel %vm76, %v428, 0
  %v553 = vsel %vm76, %v429, 0
  %v556 = vsel %vm76, %v430, 0
  %v559 = vsel %vm76, %v431, 0
  %v562 = vsel %vm76, %v432, 0
  %v565 = vsel %vm76, %v433, 0
  %v568 = vsel %vm76, %v434, 0
  %v571 = vsel %vm76, %v435, 0
  %v574 = vsel %vm76, %v436, 0
  %v577 = vsel %vm76, %v437, 0
  %v580 = vsel %vm76, %v438, 0
  %v583 = vsel %vm76, %v439, 0
  %v586 = vsel %vm76, %v440, 0
  %588 = vmatpush.msra.mxu0 0.0
  %589 = vmatpush.msra.mxu0 0.0
  %590 = vmatpush.msra.mxu0 0.0
  %591 = vmatpush.msra.mxu0 0.0
  %592 = vmatpush.msra.mxu0 0.0
  %593 = vmatpush.msra.mxu0 0.0
  %594 = vmatpush.msra.mxu0 0.0
  %595 = vmatpush.msra.mxu0 0.0
  %596 = vmatpush.msra.mxu0 0.0
  %597 = vmatpush.msra.mxu0 0.0
  %598 = vmatpush.msra.mxu0 0.0
  %599 = vmatpush.msra.mxu0 0.0
  %600 = vmatpush.msra.mxu0 %v226
  %601 = vmatpush.msra.mxu0 %v25
  %602 = vmatpush.msra.mxu0 %v24
  %603 = vmatpush.msra.mxu0 %v23
  %604 = vmatmul.f32.gmra.mxu0 %v442
  %v605 = vpop.f32.mrf.mxu0
  %v606 = vadd.f32 0.0, %v605
  %607 = vmatmul.f32.gmra.mxu0 %v445
  %v608 = vpop.f32.mrf.mxu0
  %v609 = vadd.f32 0.0, %v608
  %610 = vmatmul.f32.gmra.mxu0 %v448
  %v611 = vpop.f32.mrf.mxu0
  %v612 = vadd.f32 0.0, %v611
  %613 = vmatmul.f32.gmra.mxu0 %v451
  %v614 = vpop.f32.mrf.mxu0
  %v615 = vadd.f32 0.0, %v614
  %616 = vmatmul.f32.gmra.mxu0 %v454
  %v617 = vpop.f32.mrf.mxu0
  %v618 = vadd.f32 0.0, %v617
  %619 = vmatmul.f32.gmra.mxu0 %v457
  %v620 = vpop.f32.mrf.mxu0
  %v621 = vadd.f32 0.0, %v620
  %622 = vmatmul.f32.gmra.mxu0 %v460
  %v623 = vpop.f32.mrf.mxu0
  %v624 = vadd.f32 0.0, %v623
  %625 = vmatmul.f32.gmra.mxu0 %v463
  %v626 = vpop.f32.mrf.mxu0
  %v627 = vadd.f32 0.0, %v626
  %628 = vmatmul.f32.gmra.mxu0 %v466
  %v629 = vpop.f32.mrf.mxu0
  %v630 = vadd.f32 0.0, %v629
  %631 = vmatmul.f32.gmra.mxu0 %v469
  %v632 = vpop.f32.mrf.mxu0
  %v633 = vadd.f32 0.0, %v632
  %634 = vmatmul.f32.gmra.mxu0 %v472
  %v635 = vpop.f32.mrf.mxu0
  %v636 = vadd.f32 0.0, %v635
  %637 = vmatmul.f32.gmra.mxu0 %v475
  %v638 = vpop.f32.mrf.mxu0
  %v639 = vadd.f32 0.0, %v638
  %640 = vmatmul.f32.gmra.mxu0 %v478
  %v641 = vpop.f32.mrf.mxu0
  %v642 = vadd.f32 0.0, %v641
  %643 = vmatmul.f32.gmra.mxu0 %v481
  %v644 = vpop.f32.mrf.mxu0
  %v645 = vadd.f32 0.0, %v644
  %646 = vmatmul.f32.gmra.mxu0 %v484
  %v647 = vpop.f32.mrf.mxu0
  %v648 = vadd.f32 0.0, %v647
  %649 = vmatmul.f32.gmra.mxu0 %v487
  %v650 = vpop.f32.mrf.mxu0
  %v651 = vadd.f32 0.0, %v650
  %652 = vmatmul.f32.gmra.mxu0 %v490
  %v653 = vpop.f32.mrf.mxu0
  %v654 = vadd.f32 0.0, %v653
  %655 = vmatmul.f32.gmra.mxu0 %v493
  %v656 = vpop.f32.mrf.mxu0
  %v657 = vadd.f32 0.0, %v656
  %658 = vmatmul.f32.gmra.mxu0 %v496
  %v659 = vpop.f32.mrf.mxu0
  %v660 = vadd.f32 0.0, %v659
  %661 = vmatmul.f32.gmra.mxu0 %v499
  %v662 = vpop.f32.mrf.mxu0
  %v663 = vadd.f32 0.0, %v662
  %664 = vmatmul.f32.gmra.mxu0 %v502
  %v665 = vpop.f32.mrf.mxu0
  %v666 = vadd.f32 0.0, %v665
  %667 = vmatmul.f32.gmra.mxu0 %v505
  %v668 = vpop.f32.mrf.mxu0
  %v669 = vadd.f32 0.0, %v668
  %670 = vmatmul.f32.gmra.mxu0 %v508
  %v671 = vpop.f32.mrf.mxu0
  %v672 = vadd.f32 0.0, %v671
  %673 = vmatmul.f32.gmra.mxu0 %v511
  %v674 = vpop.f32.mrf.mxu0
  %v675 = vadd.f32 0.0, %v674
  %676 = vmatmul.f32.gmra.mxu0 %v514
  %v677 = vpop.f32.mrf.mxu0
  %v678 = vadd.f32 0.0, %v677
  %679 = vmatmul.f32.gmra.mxu0 %v517
  %v680 = vpop.f32.mrf.mxu0
  %v681 = vadd.f32 0.0, %v680
  %682 = vmatmul.f32.gmra.mxu0 %v520
  %v683 = vpop.f32.mrf.mxu0
  %v684 = vadd.f32 0.0, %v683
  %685 = vmatmul.f32.gmra.mxu0 %v523
  %v686 = vpop.f32.mrf.mxu0
  %v687 = vadd.f32 0.0, %v686
  %688 = vmatmul.f32.gmra.mxu0 %v526
  %v689 = vpop.f32.mrf.mxu0
  %v690 = vadd.f32 0.0, %v689
  %691 = vmatmul.f32.gmra.mxu0 %v529
  %v692 = vpop.f32.mrf.mxu0
  %v693 = vadd.f32 0.0, %v692
  %694 = vmatmul.f32.gmra.mxu0 %v532
  %v695 = vpop.f32.mrf.mxu0
  %v696 = vadd.f32 0.0, %v695
  %697 = vmatmul.f32.gmra.mxu0 %v535
  %v698 = vpop.f32.mrf.mxu0
  %v699 = vadd.f32 0.0, %v698
  %700 = vmatmul.f32.gmra.mxu0 %v538
  %v701 = vpop.f32.mrf.mxu0
  %v702 = vadd.f32 0.0, %v701
  %703 = vmatmul.f32.gmra.mxu0 %v541
  %v704 = vpop.f32.mrf.mxu0
  %v705 = vadd.f32 0.0, %v704
  %706 = vmatmul.f32.gmra.mxu0 %v544
  %v707 = vpop.f32.mrf.mxu0
  %v708 = vadd.f32 0.0, %v707
  %709 = vmatmul.f32.gmra.mxu0 %v547
  %v710 = vpop.f32.mrf.mxu0
  %v711 = vadd.f32 0.0, %v710
  %712 = vmatmul.f32.gmra.mxu0 %v550
  %v713 = vpop.f32.mrf.mxu0
  %v714 = vadd.f32 0.0, %v713
  %715 = vmatmul.f32.gmra.mxu0 %v553
  %v716 = vpop.f32.mrf.mxu0
  %v717 = vadd.f32 0.0, %v716
  %718 = vmatmul.f32.gmra.mxu0 %v556
  %v719 = vpop.f32.mrf.mxu0
  %v720 = vadd.f32 0.0, %v719
  %721 = vmatmul.f32.gmra.mxu0 %v559
  %v722 = vpop.f32.mrf.mxu0
  %v723 = vadd.f32 0.0, %v722
  %724 = vmatmul.f32.gmra.mxu0 %v562
  %v725 = vpop.f32.mrf.mxu0
  %v726 = vadd.f32 0.0, %v725
  %727 = vmatmul.f32.gmra.mxu0 %v565
  %v728 = vpop.f32.mrf.mxu0
  %v729 = vadd.f32 0.0, %v728
  %730 = vmatmul.f32.gmra.mxu0 %v568
  %v731 = vpop.f32.mrf.mxu0
  %v732 = vadd.f32 0.0, %v731
  %733 = vmatmul.f32.gmra.mxu0 %v571
  %v734 = vpop.f32.mrf.mxu0
  %v735 = vadd.f32 0.0, %v734
  %736 = vmatmul.f32.gmra.mxu0 %v574
  %v737 = vpop.f32.mrf.mxu0
  %v738 = vadd.f32 0.0, %v737
  %739 = vmatmul.f32.gmra.mxu0 %v577
  %v740 = vpop.f32.mrf.mxu0
  %v741 = vadd.f32 0.0, %v740
  %742 = vmatmul.f32.gmra.mxu0 %v580
  %v743 = vpop.f32.mrf.mxu0
  %v744 = vadd.f32 0.0, %v743
  %745 = vmatmul.f32.gmra.mxu0 %v583
  %v746 = vpop.f32.mrf.mxu0
  %v747 = vadd.f32 0.0, %v746
  %748 = vmatmul.f32.gmra.mxu0 %v586
  %v749 = vpop.f32.mrf.mxu0
  %v750 = vadd.f32 0.0, %v749
  %751 = vdwg.mxu0
  %v752 = vmax.f32 %v246, %v606
  %v753 = vmax.f32 %v249, %v609
  %v754 = vmax.f32 %v252, %v612
  %v755 = vmax.f32 %v255, %v615
  %v756 = vmax.f32 %v258, %v618
  %v757 = vmax.f32 %v261, %v621
  %v758 = vmax.f32 %v264, %v624
  %v759 = vmax.f32 %v267, %v627
  %v760 = vmax.f32 %v270, %v630
  %v761 = vmax.f32 %v273, %v633
  %v762 = vmax.f32 %v276, %v636
  %v763 = vmax.f32 %v279, %v639
  %v764 = vmax.f32 %v282, %v642
  %v765 = vmax.f32 %v285, %v645
  %v766 = vmax.f32 %v288, %v648
  %v767 = vmax.f32 %v291, %v651
  %v768 = vmax.f32 %v294, %v654
  %v769 = vmax.f32 %v297, %v657
  %v770 = vmax.f32 %v300, %v660
  %v771 = vmax.f32 %v303, %v663
  %v772 = vmax.f32 %v306, %v666
  %v773 = vmax.f32 %v309, %v669
  %v774 = vmax.f32 %v312, %v672
  %v775 = vmax.f32 %v315, %v675
  %v776 = vmax.f32 %v318, %v678
  %v777 = vmax.f32 %v321, %v681
  %v778 = vmax.f32 %v324, %v684
  %v779 = vmax.f32 %v327, %v687
  %v780 = vmax.f32 %v330, %v690
  %v781 = vmax.f32 %v333, %v693
  %v782 = vmax.f32 %v336, %v696
  %v783 = vmax.f32 %v339, %v699
  %v784 = vmax.f32 %v342, %v702
  %v785 = vmax.f32 %v345, %v705
  %v786 = vmax.f32 %v348, %v708
  %v787 = vmax.f32 %v351, %v711
  %v788 = vmax.f32 %v354, %v714
  %v789 = vmax.f32 %v357, %v717
  %v790 = vmax.f32 %v360, %v720
  %v791 = vmax.f32 %v363, %v723
  %v792 = vmax.f32 %v366, %v726
  %v793 = vmax.f32 %v369, %v729
  %v794 = vmax.f32 %v372, %v732
  %v795 = vmax.f32 %v375, %v735
  %v796 = vmax.f32 %v378, %v738
  %v797 = vmax.f32 %v381, %v741
  %v798 = vmax.f32 %v384, %v744
  %v799 = vmax.f32 %v387, %v747
  %v800 = vmax.f32 %v390, %v750
  %v801 = vld [vmem:[%s2] sm:$0xff]
  %v802 = vld [vmem:[%s2 + $0x8] sm:$0xff]
  %v803 = vld [vmem:[%s2 + $0x10] sm:$0xff]
  %v804 = vld [vmem:[%s2 + $0x18] sm:$0xff]
  %v805 = vld [vmem:[%s2 + $0x20] sm:$0xff]
  %v806 = vld [vmem:[%s2 + $0x28] sm:$0xff]
  %v807 = vld [vmem:[%s2 + $0x30] sm:$0xff]
  %v808 = vld [vmem:[%s2 + $0x38] sm:$0xff]
  %v809 = vld [vmem:[%s2 + $0x40] sm:$0xff]
  %v810 = vld [vmem:[%s2 + $0x48] sm:$0xff]
  %v811 = vld [vmem:[%s2 + $0x50] sm:$0xff]
  %v812 = vld [vmem:[%s2 + $0x58] sm:$0xff]
  %v813 = vld [vmem:[%s2 + $0x60] sm:$0xff]
  %v814 = vld [vmem:[%s2 + $0x68] sm:$0xff]
  %v815 = vld [vmem:[%s2 + $0x70] sm:$0xff]
  %v816 = vld [vmem:[%s2 + $0x78] sm:$0xff]
  %v817 = vld [vmem:[%s2 + $0x80] sm:$0xff]
  %v818 = vld [vmem:[%s2 + $0x88] sm:$0xff]
  %v819 = vld [vmem:[%s2 + $0x90] sm:$0xff]
  %v820 = vld [vmem:[%s2 + $0x98] sm:$0xff]
  %v821 = vld [vmem:[%s2 + $0xa0] sm:$0xff]
  %v822 = vld [vmem:[%s2 + $0xa8] sm:$0xff]
  %v823 = vld [vmem:[%s2 + $0xb0] sm:$0xff]
  %v824 = vld [vmem:[%s2 + $0xb8] sm:$0xff]
  %v825 = vld [vmem:[%s2 + $0xc0] sm:$0xff]
  %v826 = vld [vmem:[%s2 + $0xc8] sm:$0xff]
  %v827 = vld [vmem:[%s2 + $0xd0] sm:$0xff]
  %v828 = vld [vmem:[%s2 + $0xd8] sm:$0xff]
  %v829 = vld [vmem:[%s2 + $0xe0] sm:$0xff]
  %v830 = vld [vmem:[%s2 + $0xe8] sm:$0xff]
  %v831 = vld [vmem:[%s2 + $0xf0] sm:$0xff]
  %v832 = vld [vmem:[%s2 + $0xf8] sm:$0xff]
  %v833 = vld [vmem:[%s2 + $0x100] sm:$0xff]
  %v834 = vld [vmem:[%s2 + $0x108] sm:$0xff]
  %v835 = vld [vmem:[%s2 + $0x110] sm:$0xff]
  %v836 = vld [vmem:[%s2 + $0x118] sm:$0xff]
  %v837 = vld [vmem:[%s2 + $0x120] sm:$0xff]
  %v838 = vld [vmem:[%s2 + $0x128] sm:$0xff]
  %v839 = vld [vmem:[%s2 + $0x130] sm:$0xff]
  %v840 = vld [vmem:[%s2 + $0x138] sm:$0xff]
  %v841 = vld [vmem:[%s2 + $0x140] sm:$0xff]
  %v842 = vld [vmem:[%s2 + $0x148] sm:$0xff]
  %v843 = vld [vmem:[%s2 + $0x150] sm:$0xff]
  %v844 = vld [vmem:[%s2 + $0x158] sm:$0xff]
  %v845 = vld [vmem:[%s2 + $0x160] sm:$0xff]
  %v846 = vld [vmem:[%s2 + $0x168] sm:$0xff]
  %v847 = vld [vmem:[%s2 + $0x170] sm:$0xff]
  %v848 = vld [vmem:[%s2 + $0x178] sm:$0xff]
  %v849 = vld [vmem:[%s2 + $0x180] sm:$0xff]
  %v851 = vsel %vm76, %v801, 0
  %v854 = vsel %vm76, %v802, 0
  %v857 = vsel %vm76, %v803, 0
  %v860 = vsel %vm76, %v804, 0
  %v863 = vsel %vm76, %v805, 0
  %v866 = vsel %vm76, %v806, 0
  %v869 = vsel %vm76, %v807, 0
  %v872 = vsel %vm76, %v808, 0
  %v875 = vsel %vm76, %v809, 0
  %v878 = vsel %vm76, %v810, 0
  %v881 = vsel %vm76, %v811, 0
  %v884 = vsel %vm76, %v812, 0
  %v887 = vsel %vm76, %v813, 0
  %v890 = vsel %vm76, %v814, 0
  %v893 = vsel %vm76, %v815, 0
  %v896 = vsel %vm76, %v816, 0
  %v899 = vsel %vm76, %v817, 0
  %v902 = vsel %vm76, %v818, 0
  %v905 = vsel %vm76, %v819, 0
  %v908 = vsel %vm76, %v820, 0
  %v911 = vsel %vm76, %v821, 0
  %v914 = vsel %vm76, %v822, 0
  %v917 = vsel %vm76, %v823, 0
  %v920 = vsel %vm76, %v824, 0
  %v923 = vsel %vm76, %v825, 0
  %v926 = vsel %vm76, %v826, 0
  %v929 = vsel %vm76, %v827, 0
  %v932 = vsel %vm76, %v828, 0
  %v935 = vsel %vm76, %v829, 0
  %v938 = vsel %vm76, %v830, 0
  %v941 = vsel %vm76, %v831, 0
  %v944 = vsel %vm76, %v832, 0
  %v947 = vsel %vm76, %v833, 0
  %v950 = vsel %vm76, %v834, 0
  %v953 = vsel %vm76, %v835, 0
  %v956 = vsel %vm76, %v836, 0
  %v959 = vsel %vm76, %v837, 0
  %v962 = vsel %vm76, %v838, 0
  %v965 = vsel %vm76, %v839, 0
  %v968 = vsel %vm76, %v840, 0
  %v971 = vsel %vm76, %v841, 0
  %v974 = vsel %vm76, %v842, 0
  %v977 = vsel %vm76, %v843, 0
  %v980 = vsel %vm76, %v844, 0
  %v983 = vsel %vm76, %v845, 0
  %v986 = vsel %vm76, %v846, 0
  %v989 = vsel %vm76, %v847, 0
  %v992 = vsel %vm76, %v848, 0
  %v995 = vsel %vm76, %v849, 0
  %997 = vmatpush.msra.mxu0 0.0
  %998 = vmatpush.msra.mxu0 0.0
  %999 = vmatpush.msra.mxu0 0.0
  %1000 = vmatpush.msra.mxu0 0.0
  %1001 = vmatpush.msra.mxu0 0.0
  %1002 = vmatpush.msra.mxu0 0.0
  %1003 = vmatpush.msra.mxu0 0.0
  %1004 = vmatpush.msra.mxu0 0.0
  %1005 = vmatpush.msra.mxu0 0.0
  %1006 = vmatpush.msra.mxu0 0.0
  %1007 = vmatpush.msra.mxu0 0.0
  %1008 = vmatpush.msra.mxu0 0.0
  %1009 = vmatpush.msra.mxu0 %v226
  %1010 = vmatpush.msra.mxu0 %v25
  %1011 = vmatpush.msra.mxu0 %v24
  %1012 = vmatpush.msra.mxu0 %v23
  %1013 = vmatmul.f32.gmra.mxu0 %v851
  %v1014 = vpop.f32.mrf.mxu0
  %v1015 = vadd.f32 0.0, %v1014
  %1016 = vmatmul.f32.gmra.mxu0 %v854
  %v1017 = vpop.f32.mrf.mxu0
  %v1018 = vadd.f32 0.0, %v1017
  %1019 = vmatmul.f32.gmra.mxu0 %v857
  %v1020 = vpop.f32.mrf.mxu0
  %v1021 = vadd.f32 0.0, %v1020
  %1022 = vmatmul.f32.gmra.mxu0 %v860
  %v1023 = vpop.f32.mrf.mxu0
  %v1024 = vadd.f32 0.0, %v1023
  %1025 = vmatmul.f32.gmra.mxu0 %v863
  %v1026 = vpop.f32.mrf.mxu0
  %v1027 = vadd.f32 0.0, %v1026
  %1028 = vmatmul.f32.gmra.mxu0 %v866
  %v1029 = vpop.f32.mrf.mxu0
  %v1030 = vadd.f32 0.0, %v1029
  %1031 = vmatmul.f32.gmra.mxu0 %v869
  %v1032 = vpop.f32.mrf.mxu0
  %v1033 = vadd.f32 0.0, %v1032
  %1034 = vmatmul.f32.gmra.mxu0 %v872
  %v1035 = vpop.f32.mrf.mxu0
  %v1036 = vadd.f32 0.0, %v1035
  %1037 = vmatmul.f32.gmra.mxu0 %v875
  %v1038 = vpop.f32.mrf.mxu0
  %v1039 = vadd.f32 0.0, %v1038
  %1040 = vmatmul.f32.gmra.mxu0 %v878
  %v1041 = vpop.f32.mrf.mxu0
  %v1042 = vadd.f32 0.0, %v1041
  %1043 = vmatmul.f32.gmra.mxu0 %v881
  %v1044 = vpop.f32.mrf.mxu0
  %v1045 = vadd.f32 0.0, %v1044
  %1046 = vmatmul.f32.gmra.mxu0 %v884
  %v1047 = vpop.f32.mrf.mxu0
  %v1048 = vadd.f32 0.0, %v1047
  %1049 = vmatmul.f32.gmra.mxu0 %v887
  %v1050 = vpop.f32.mrf.mxu0
  %v1051 = vadd.f32 0.0, %v1050
  %1052 = vmatmul.f32.gmra.mxu0 %v890
  %v1053 = vpop.f32.mrf.mxu0
  %v1054 = vadd.f32 0.0, %v1053
  %1055 = vmatmul.f32.gmra.mxu0 %v893
  %v1056 = vpop.f32.mrf.mxu0
  %v1057 = vadd.f32 0.0, %v1056
  %1058 = vmatmul.f32.gmra.mxu0 %v896
  %v1059 = vpop.f32.mrf.mxu0
  %v1060 = vadd.f32 0.0, %v1059
  %1061 = vmatmul.f32.gmra.mxu0 %v899
  %v1062 = vpop.f32.mrf.mxu0
  %v1063 = vadd.f32 0.0, %v1062
  %1064 = vmatmul.f32.gmra.mxu0 %v902
  %v1065 = vpop.f32.mrf.mxu0
  %v1066 = vadd.f32 0.0, %v1065
  %1067 = vmatmul.f32.gmra.mxu0 %v905
  %v1068 = vpop.f32.mrf.mxu0
  %v1069 = vadd.f32 0.0, %v1068
  %1070 = vmatmul.f32.gmra.mxu0 %v908
  %v1071 = vpop.f32.mrf.mxu0
  %v1072 = vadd.f32 0.0, %v1071
  %1073 = vmatmul.f32.gmra.mxu0 %v911
  %v1074 = vpop.f32.mrf.mxu0
  %v1075 = vadd.f32 0.0, %v1074
  %1076 = vmatmul.f32.gmra.mxu0 %v914
  %v1077 = vpop.f32.mrf.mxu0
  %v1078 = vadd.f32 0.0, %v1077
  %1079 = vmatmul.f32.gmra.mxu0 %v917
  %v1080 = vpop.f32.mrf.mxu0
  %v1081 = vadd.f32 0.0, %v1080
  %1082 = vmatmul.f32.gmra.mxu0 %v920
  %v1083 = vpop.f32.mrf.mxu0
  %v1084 = vadd.f32 0.0, %v1083
  %1085 = vmatmul.f32.gmra.mxu0 %v923
  %v1086 = vpop.f32.mrf.mxu0
  %v1087 = vadd.f32 0.0, %v1086
  %1088 = vmatmul.f32.gmra.mxu0 %v926
  %v1089 = vpop.f32.mrf.mxu0
  %v1090 = vadd.f32 0.0, %v1089
  %1091 = vmatmul.f32.gmra.mxu0 %v929
  %v1092 = vpop.f32.mrf.mxu0
  %v1093 = vadd.f32 0.0, %v1092
  %1094 = vmatmul.f32.gmra.mxu0 %v932
  %v1095 = vpop.f32.mrf.mxu0
  %v1096 = vadd.f32 0.0, %v1095
  %1097 = vmatmul.f32.gmra.mxu0 %v935
  %v1098 = vpop.f32.mrf.mxu0
  %v1099 = vadd.f32 0.0, %v1098
  %1100 = vmatmul.f32.gmra.mxu0 %v938
  %v1101 = vpop.f32.mrf.mxu0
  %v1102 = vadd.f32 0.0, %v1101
  %1103 = vmatmul.f32.gmra.mxu0 %v941
  %v1104 = vpop.f32.mrf.mxu0
  %v1105 = vadd.f32 0.0, %v1104
  %1106 = vmatmul.f32.gmra.mxu0 %v944
  %v1107 = vpop.f32.mrf.mxu0
  %v1108 = vadd.f32 0.0, %v1107
  %1109 = vmatmul.f32.gmra.mxu0 %v947
  %v1110 = vpop.f32.mrf.mxu0
  %v1111 = vadd.f32 0.0, %v1110
  %1112 = vmatmul.f32.gmra.mxu0 %v950
  %v1113 = vpop.f32.mrf.mxu0
  %v1114 = vadd.f32 0.0, %v1113
  %1115 = vmatmul.f32.gmra.mxu0 %v953
  %v1116 = vpop.f32.mrf.mxu0
  %v1117 = vadd.f32 0.0, %v1116
  %1118 = vmatmul.f32.gmra.mxu0 %v956
  %v1119 = vpop.f32.mrf.mxu0
  %v1120 = vadd.f32 0.0, %v1119
  %1121 = vmatmul.f32.gmra.mxu0 %v959
  %v1122 = vpop.f32.mrf.mxu0
  %v1123 = vadd.f32 0.0, %v1122
  %1124 = vmatmul.f32.gmra.mxu0 %v962
  %v1125 = vpop.f32.mrf.mxu0
  %v1126 = vadd.f32 0.0, %v1125
  %1127 = vmatmul.f32.gmra.mxu0 %v965
  %v1128 = vpop.f32.mrf.mxu0
  %v1129 = vadd.f32 0.0, %v1128
  %1130 = vmatmul.f32.gmra.mxu0 %v968
  %v1131 = vpop.f32.mrf.mxu0
  %v1132 = vadd.f32 0.0, %v1131
  %1133 = vmatmul.f32.gmra.mxu0 %v971
  %v1134 = vpop.f32.mrf.mxu0
  %v1135 = vadd.f32 0.0, %v1134
  %1136 = vmatmul.f32.gmra.mxu0 %v974
  %v1137 = vpop.f32.mrf.mxu0
  %v1138 = vadd.f32 0.0, %v1137
  %1139 = vmatmul.f32.gmra.mxu0 %v977
  %v1140 = vpop.f32.mrf.mxu0
  %v1141 = vadd.f32 0.0, %v1140
  %1142 = vmatmul.f32.gmra.mxu0 %v980
  %v1143 = vpop.f32.mrf.mxu0
  %v1144 = vadd.f32 0.0, %v1143
  %1145 = vmatmul.f32.gmra.mxu0 %v983
  %v1146 = vpop.f32.mrf.mxu0
  %v1147 = vadd.f32 0.0, %v1146
  %1148 = vmatmul.f32.gmra.mxu0 %v986
  %v1149 = vpop.f32.mrf.mxu0
  %v1150 = vadd.f32 0.0, %v1149
  %1151 = vmatmul.f32.gmra.mxu0 %v989
  %v1152 = vpop.f32.mrf.mxu0
  %v1153 = vadd.f32 0.0, %v1152
  %1154 = vmatmul.f32.gmra.mxu0 %v992
  %v1155 = vpop.f32.mrf.mxu0
  %v1156 = vadd.f32 0.0, %v1155
  %1157 = vmatmul.f32.gmra.mxu0 %v995
  %v1158 = vpop.f32.mrf.mxu0
  %v1159 = vadd.f32 0.0, %v1158
  %1160 = vdwg.mxu0
  %v1161 = vld [vmem:[%s3] sm:$0xff]
  %v1162 = vld [vmem:[%s3 + $0x8] sm:$0xff]
  %v1163 = vld [vmem:[%s3 + $0x10] sm:$0xff]
  %v1164 = vld [vmem:[%s3 + $0x18] sm:$0xff]
  %v1165 = vld [vmem:[%s3 + $0x20] sm:$0xff]
  %v1166 = vld [vmem:[%s3 + $0x28] sm:$0xff]
  %v1167 = vld [vmem:[%s3 + $0x30] sm:$0xff]
  %v1168 = vld [vmem:[%s3 + $0x38] sm:$0xff]
  %v1169 = vld [vmem:[%s3 + $0x40] sm:$0xff]
  %v1170 = vld [vmem:[%s3 + $0x48] sm:$0xff]
  %v1171 = vld [vmem:[%s3 + $0x50] sm:$0xff]
  %v1172 = vld [vmem:[%s3 + $0x58] sm:$0xff]
  %v1173 = vld [vmem:[%s3 + $0x60] sm:$0xff]
  %v1174 = vld [vmem:[%s3 + $0x68] sm:$0xff]
  %v1175 = vld [vmem:[%s3 + $0x70] sm:$0xff]
  %v1176 = vld [vmem:[%s3 + $0x78] sm:$0xff]
  %v1177 = vld [vmem:[%s3 + $0x80] sm:$0xff]
  %v1178 = vld [vmem:[%s3 + $0x88] sm:$0xff]
  %v1179 = vld [vmem:[%s3 + $0x90] sm:$0xff]
  %v1180 = vld [vmem:[%s3 + $0x98] sm:$0xff]
  %v1181 = vld [vmem:[%s3 + $0xa0] sm:$0xff]
  %v1182 = vld [vmem:[%s3 + $0xa8] sm:$0xff]
  %v1183 = vld [vmem:[%s3 + $0xb0] sm:$0xff]
  %v1184 = vld [vmem:[%s3 + $0xb8] sm:$0xff]
  %v1185 = vld [vmem:[%s3 + $0xc0] sm:$0xff]
  %v1186 = vld [vmem:[%s3 + $0xc8] sm:$0xff]
  %v1187 = vld [vmem:[%s3 + $0xd0] sm:$0xff]
  %v1188 = vld [vmem:[%s3 + $0xd8] sm:$0xff]
  %v1189 = vld [vmem:[%s3 + $0xe0] sm:$0xff]
  %v1190 = vld [vmem:[%s3 + $0xe8] sm:$0xff]
  %v1191 = vld [vmem:[%s3 + $0xf0] sm:$0xff]
  %v1192 = vld [vmem:[%s3 + $0xf8] sm:$0xff]
  %v1193 = vld [vmem:[%s3 + $0x100] sm:$0xff]
  %v1194 = vld [vmem:[%s3 + $0x108] sm:$0xff]
  %v1195 = vld [vmem:[%s3 + $0x110] sm:$0xff]
  %v1196 = vld [vmem:[%s3 + $0x118] sm:$0xff]
  %v1197 = vld [vmem:[%s3 + $0x120] sm:$0xff]
  %v1198 = vld [vmem:[%s3 + $0x128] sm:$0xff]
  %v1199 = vld [vmem:[%s3 + $0x130] sm:$0xff]
  %v1200 = vld [vmem:[%s3 + $0x138] sm:$0xff]
  %v1201 = vld [vmem:[%s3 + $0x140] sm:$0xff]
  %v1202 = vld [vmem:[%s3 + $0x148] sm:$0xff]
  %v1203 = vld [vmem:[%s3 + $0x150] sm:$0xff]
  %v1204 = vld [vmem:[%s3 + $0x158] sm:$0xff]
  %v1205 = vld [vmem:[%s3 + $0x160] sm:$0xff]
  %v1206 = vld [vmem:[%s3 + $0x168] sm:$0xff]
  %v1207 = vld [vmem:[%s3 + $0x170] sm:$0xff]
  %v1208 = vld [vmem:[%s3 + $0x178] sm:$0xff]
  %v1209 = vld [vmem:[%s3 + $0x180] sm:$0xff]
  %v1211 = vsel %vm76, %v1161, 0
  %v1214 = vsel %vm76, %v1162, 0
  %v1217 = vsel %vm76, %v1163, 0
  %v1220 = vsel %vm76, %v1164, 0
  %v1223 = vsel %vm76, %v1165, 0
  %v1226 = vsel %vm76, %v1166, 0
  %v1229 = vsel %vm76, %v1167, 0
  %v1232 = vsel %vm76, %v1168, 0
  %v1235 = vsel %vm76, %v1169, 0
  %v1238 = vsel %vm76, %v1170, 0
  %v1241 = vsel %vm76, %v1171, 0
  %v1244 = vsel %vm76, %v1172, 0
  %v1247 = vsel %vm76, %v1173, 0
  %v1250 = vsel %vm76, %v1174, 0
  %v1253 = vsel %vm76, %v1175, 0
  %v1256 = vsel %vm76, %v1176, 0
  %v1259 = vsel %vm76, %v1177, 0
  %v1262 = vsel %vm76, %v1178, 0
  %v1265 = vsel %vm76, %v1179, 0
  %v1268 = vsel %vm76, %v1180, 0
  %v1271 = vsel %vm76, %v1181, 0
  %v1274 = vsel %vm76, %v1182, 0
  %v1277 = vsel %vm76, %v1183, 0
  %v1280 = vsel %vm76, %v1184, 0
  %v1283 = vsel %vm76, %v1185, 0
  %v1286 = vsel %vm76, %v1186, 0
  %v1289 = vsel %vm76, %v1187, 0
  %v1292 = vsel %vm76, %v1188, 0
  %v1295 = vsel %vm76, %v1189, 0
  %v1298 = vsel %vm76, %v1190, 0
  %v1301 = vsel %vm76, %v1191, 0
  %v1304 = vsel %vm76, %v1192, 0
  %v1307 = vsel %vm76, %v1193, 0
  %v1310 = vsel %vm76, %v1194, 0
  %v1313 = vsel %vm76, %v1195, 0
  %v1316 = vsel %vm76, %v1196, 0
  %v1319 = vsel %vm76, %v1197, 0
  %v1322 = vsel %vm76, %v1198, 0
  %v1325 = vsel %vm76, %v1199, 0
  %v1328 = vsel %vm76, %v1200, 0
  %v1331 = vsel %vm76, %v1201, 0
  %v1334 = vsel %vm76, %v1202, 0
  %v1337 = vsel %vm76, %v1203, 0
  %v1340 = vsel %vm76, %v1204, 0
  %v1343 = vsel %vm76, %v1205, 0
  %v1346 = vsel %vm76, %v1206, 0
  %v1349 = vsel %vm76, %v1207, 0
  %v1352 = vsel %vm76, %v1208, 0
  %v1355 = vsel %vm76, %v1209, 0
  %1357 = vmatpush.msra.mxu0 0.0
  %1358 = vmatpush.msra.mxu0 0.0
  %1359 = vmatpush.msra.mxu0 0.0
  %1360 = vmatpush.msra.mxu0 0.0
  %1361 = vmatpush.msra.mxu0 0.0
  %1362 = vmatpush.msra.mxu0 0.0
  %1363 = vmatpush.msra.mxu0 0.0
  %1364 = vmatpush.msra.mxu0 0.0
  %1365 = vmatpush.msra.mxu0 0.0
  %1366 = vmatpush.msra.mxu0 0.0
  %1367 = vmatpush.msra.mxu0 0.0
  %1368 = vmatpush.msra.mxu0 0.0
  %1369 = vmatpush.msra.mxu0 %v226
  %1370 = vmatpush.msra.mxu0 %v25
  %1371 = vmatpush.msra.mxu0 %v24
  %1372 = vmatpush.msra.mxu0 %v23
  %1373 = vmatmul.f32.gmra.mxu0 %v1211
  %v1374 = vpop.f32.mrf.mxu0
  %v1375 = vadd.f32 0.0, %v1374
  %1376 = vmatmul.f32.gmra.mxu0 %v1214
  %v1377 = vpop.f32.mrf.mxu0
  %v1378 = vadd.f32 0.0, %v1377
  %1379 = vmatmul.f32.gmra.mxu0 %v1217
  %v1380 = vpop.f32.mrf.mxu0
  %v1381 = vadd.f32 0.0, %v1380
  %1382 = vmatmul.f32.gmra.mxu0 %v1220
  %v1383 = vpop.f32.mrf.mxu0
  %v1384 = vadd.f32 0.0, %v1383
  %1385 = vmatmul.f32.gmra.mxu0 %v1223
  %v1386 = vpop.f32.mrf.mxu0
  %v1387 = vadd.f32 0.0, %v1386
  %1388 = vmatmul.f32.gmra.mxu0 %v1226
  %v1389 = vpop.f32.mrf.mxu0
  %v1390 = vadd.f32 0.0, %v1389
  %1391 = vmatmul.f32.gmra.mxu0 %v1229
  %v1392 = vpop.f32.mrf.mxu0
  %v1393 = vadd.f32 0.0, %v1392
  %1394 = vmatmul.f32.gmra.mxu0 %v1232
  %v1395 = vpop.f32.mrf.mxu0
  %v1396 = vadd.f32 0.0, %v1395
  %1397 = vmatmul.f32.gmra.mxu0 %v1235
  %v1398 = vpop.f32.mrf.mxu0
  %v1399 = vadd.f32 0.0, %v1398
  %1400 = vmatmul.f32.gmra.mxu0 %v1238
  %v1401 = vpop.f32.mrf.mxu0
  %v1402 = vadd.f32 0.0, %v1401
  %1403 = vmatmul.f32.gmra.mxu0 %v1241
  %v1404 = vpop.f32.mrf.mxu0
  %v1405 = vadd.f32 0.0, %v1404
  %1406 = vmatmul.f32.gmra.mxu0 %v1244
  %v1407 = vpop.f32.mrf.mxu0
  %v1408 = vadd.f32 0.0, %v1407
  %1409 = vmatmul.f32.gmra.mxu0 %v1247
  %v1410 = vpop.f32.mrf.mxu0
  %v1411 = vadd.f32 0.0, %v1410
  %1412 = vmatmul.f32.gmra.mxu0 %v1250
  %v1413 = vpop.f32.mrf.mxu0
  %v1414 = vadd.f32 0.0, %v1413
  %1415 = vmatmul.f32.gmra.mxu0 %v1253
  %v1416 = vpop.f32.mrf.mxu0
  %v1417 = vadd.f32 0.0, %v1416
  %1418 = vmatmul.f32.gmra.mxu0 %v1256
  %v1419 = vpop.f32.mrf.mxu0
  %v1420 = vadd.f32 0.0, %v1419
  %1421 = vmatmul.f32.gmra.mxu0 %v1259
  %v1422 = vpop.f32.mrf.mxu0
  %v1423 = vadd.f32 0.0, %v1422
  %1424 = vmatmul.f32.gmra.mxu0 %v1262
  %v1425 = vpop.f32.mrf.mxu0
  %v1426 = vadd.f32 0.0, %v1425
  %1427 = vmatmul.f32.gmra.mxu0 %v1265
  %v1428 = vpop.f32.mrf.mxu0
  %v1429 = vadd.f32 0.0, %v1428
  %1430 = vmatmul.f32.gmra.mxu0 %v1268
  %v1431 = vpop.f32.mrf.mxu0
  %v1432 = vadd.f32 0.0, %v1431
  %1433 = vmatmul.f32.gmra.mxu0 %v1271
  %v1434 = vpop.f32.mrf.mxu0
  %v1435 = vadd.f32 0.0, %v1434
  %1436 = vmatmul.f32.gmra.mxu0 %v1274
  %v1437 = vpop.f32.mrf.mxu0
  %v1438 = vadd.f32 0.0, %v1437
  %1439 = vmatmul.f32.gmra.mxu0 %v1277
  %v1440 = vpop.f32.mrf.mxu0
  %v1441 = vadd.f32 0.0, %v1440
  %1442 = vmatmul.f32.gmra.mxu0 %v1280
  %v1443 = vpop.f32.mrf.mxu0
  %v1444 = vadd.f32 0.0, %v1443
  %1445 = vmatmul.f32.gmra.mxu0 %v1283
  %v1446 = vpop.f32.mrf.mxu0
  %v1447 = vadd.f32 0.0, %v1446
  %1448 = vmatmul.f32.gmra.mxu0 %v1286
  %v1449 = vpop.f32.mrf.mxu0
  %v1450 = vadd.f32 0.0, %v1449
  %1451 = vmatmul.f32.gmra.mxu0 %v1289
  %v1452 = vpop.f32.mrf.mxu0
  %v1453 = vadd.f32 0.0, %v1452
  %1454 = vmatmul.f32.gmra.mxu0 %v1292
  %v1455 = vpop.f32.mrf.mxu0
  %v1456 = vadd.f32 0.0, %v1455
  %1457 = vmatmul.f32.gmra.mxu0 %v1295
  %v1458 = vpop.f32.mrf.mxu0
  %v1459 = vadd.f32 0.0, %v1458
  %1460 = vmatmul.f32.gmra.mxu0 %v1298
  %v1461 = vpop.f32.mrf.mxu0
  %v1462 = vadd.f32 0.0, %v1461
  %1463 = vmatmul.f32.gmra.mxu0 %v1301
  %v1464 = vpop.f32.mrf.mxu0
  %v1465 = vadd.f32 0.0, %v1464
  %1466 = vmatmul.f32.gmra.mxu0 %v1304
  %v1467 = vpop.f32.mrf.mxu0
  %v1468 = vadd.f32 0.0, %v1467
  %1469 = vmatmul.f32.gmra.mxu0 %v1307
  %v1470 = vpop.f32.mrf.mxu0
  %v1471 = vadd.f32 0.0, %v1470
  %1472 = vmatmul.f32.gmra.mxu0 %v1310
  %v1473 = vpop.f32.mrf.mxu0
  %v1474 = vadd.f32 0.0, %v1473
  %1475 = vmatmul.f32.gmra.mxu0 %v1313
  %v1476 = vpop.f32.mrf.mxu0
  %v1477 = vadd.f32 0.0, %v1476
  %1478 = vmatmul.f32.gmra.mxu0 %v1316
  %v1479 = vpop.f32.mrf.mxu0
  %v1480 = vadd.f32 0.0, %v1479
  %1481 = vmatmul.f32.gmra.mxu0 %v1319
  %v1482 = vpop.f32.mrf.mxu0
  %v1483 = vadd.f32 0.0, %v1482
  %1484 = vmatmul.f32.gmra.mxu0 %v1322
  %v1485 = vpop.f32.mrf.mxu0
  %v1486 = vadd.f32 0.0, %v1485
  %1487 = vmatmul.f32.gmra.mxu0 %v1325
  %v1488 = vpop.f32.mrf.mxu0
  %v1489 = vadd.f32 0.0, %v1488
  %1490 = vmatmul.f32.gmra.mxu0 %v1328
  %v1491 = vpop.f32.mrf.mxu0
  %v1492 = vadd.f32 0.0, %v1491
  %1493 = vmatmul.f32.gmra.mxu0 %v1331
  %v1494 = vpop.f32.mrf.mxu0
  %v1495 = vadd.f32 0.0, %v1494
  %1496 = vmatmul.f32.gmra.mxu0 %v1334
  %v1497 = vpop.f32.mrf.mxu0
  %v1498 = vadd.f32 0.0, %v1497
  %1499 = vmatmul.f32.gmra.mxu0 %v1337
  %v1500 = vpop.f32.mrf.mxu0
  %v1501 = vadd.f32 0.0, %v1500
  %1502 = vmatmul.f32.gmra.mxu0 %v1340
  %v1503 = vpop.f32.mrf.mxu0
  %v1504 = vadd.f32 0.0, %v1503
  %1505 = vmatmul.f32.gmra.mxu0 %v1343
  %v1506 = vpop.f32.mrf.mxu0
  %v1507 = vadd.f32 0.0, %v1506
  %1508 = vmatmul.f32.gmra.mxu0 %v1346
  %v1509 = vpop.f32.mrf.mxu0
  %v1510 = vadd.f32 0.0, %v1509
  %1511 = vmatmul.f32.gmra.mxu0 %v1349
  %v1512 = vpop.f32.mrf.mxu0
  %v1513 = vadd.f32 0.0, %v1512
  %1514 = vmatmul.f32.gmra.mxu0 %v1352
  %v1515 = vpop.f32.mrf.mxu0
  %v1516 = vadd.f32 0.0, %v1515
  %1517 = vmatmul.f32.gmra.mxu0 %v1355
  %v1518 = vpop.f32.mrf.mxu0
  %v1519 = vadd.f32 0.0, %v1518
  %1520 = vdwg.mxu0
  %v1521 = vmax.f32 %v1015, %v1375
  %v1522 = vmax.f32 %v1018, %v1378
  %v1523 = vmax.f32 %v1021, %v1381
  %v1524 = vmax.f32 %v1024, %v1384
  %v1525 = vmax.f32 %v1027, %v1387
  %v1526 = vmax.f32 %v1030, %v1390
  %v1527 = vmax.f32 %v1033, %v1393
  %v1528 = vmax.f32 %v1036, %v1396
  %v1529 = vmax.f32 %v1039, %v1399
  %v1530 = vmax.f32 %v1042, %v1402
  %v1531 = vmax.f32 %v1045, %v1405
  %v1532 = vmax.f32 %v1048, %v1408
  %v1533 = vmax.f32 %v1051, %v1411
  %v1534 = vmax.f32 %v1054, %v1414
  %v1535 = vmax.f32 %v1057, %v1417
  %v1536 = vmax.f32 %v1060, %v1420
  %v1537 = vmax.f32 %v1063, %v1423
  %v1538 = vmax.f32 %v1066, %v1426
  %v1539 = vmax.f32 %v1069, %v1429
  %v1540 = vmax.f32 %v1072, %v1432
  %v1541 = vmax.f32 %v1075, %v1435
  %v1542 = vmax.f32 %v1078, %v1438
  %v1543 = vmax.f32 %v1081, %v1441
  %v1544 = vmax.f32 %v1084, %v1444
  %v1545 = vmax.f32 %v1087, %v1447
  %v1546 = vmax.f32 %v1090, %v1450
  %v1547 = vmax.f32 %v1093, %v1453
  %v1548 = vmax.f32 %v1096, %v1456
  %v1549 = vmax.f32 %v1099, %v1459
  %v1550 = vmax.f32 %v1102, %v1462
  %v1551 = vmax.f32 %v1105, %v1465
  %v1552 = vmax.f32 %v1108, %v1468
  %v1553 = vmax.f32 %v1111, %v1471
  %v1554 = vmax.f32 %v1114, %v1474
  %v1555 = vmax.f32 %v1117, %v1477
  %v1556 = vmax.f32 %v1120, %v1480
  %v1557 = vmax.f32 %v1123, %v1483
  %v1558 = vmax.f32 %v1126, %v1486
  %v1559 = vmax.f32 %v1129, %v1489
  %v1560 = vmax.f32 %v1132, %v1492
  %v1561 = vmax.f32 %v1135, %v1495
  %v1562 = vmax.f32 %v1138, %v1498
  %v1563 = vmax.f32 %v1141, %v1501
  %v1564 = vmax.f32 %v1144, %v1504
  %v1565 = vmax.f32 %v1147, %v1507
  %v1566 = vmax.f32 %v1150, %v1510
  %v1567 = vmax.f32 %v1153, %v1513
  %v1568 = vmax.f32 %v1156, %v1516
  %v1569 = vmax.f32 %v1159, %v1519
  %v1570 = vmax.f32 %v752, %v1521
  %v1571 = vmax.f32 %v753, %v1522
  %v1572 = vmax.f32 %v754, %v1523
  %v1573 = vmax.f32 %v755, %v1524
  %v1574 = vmax.f32 %v756, %v1525
  %v1575 = vmax.f32 %v757, %v1526
  %v1576 = vmax.f32 %v758, %v1527
  %v1577 = vmax.f32 %v759, %v1528
  %v1578 = vmax.f32 %v760, %v1529
  %v1579 = vmax.f32 %v761, %v1530
  %v1580 = vmax.f32 %v762, %v1531
  %v1581 = vmax.f32 %v763, %v1532
  %v1582 = vmax.f32 %v764, %v1533
  %v1583 = vmax.f32 %v765, %v1534
  %v1584 = vmax.f32 %v766, %v1535
  %v1585 = vmax.f32 %v767, %v1536
  %v1586 = vmax.f32 %v768, %v1537
  %v1587 = vmax.f32 %v769, %v1538
  %v1588 = vmax.f32 %v770, %v1539
  %v1589 = vmax.f32 %v771, %v1540
  %v1590 = vmax.f32 %v772, %v1541
  %v1591 = vmax.f32 %v773, %v1542
  %v1592 = vmax.f32 %v774, %v1543
  %v1593 = vmax.f32 %v775, %v1544
  %v1594 = vmax.f32 %v776, %v1545
  %v1595 = vmax.f32 %v777, %v1546
  %v1596 = vmax.f32 %v778, %v1547
  %v1597 = vmax.f32 %v779, %v1548
  %v1598 = vmax.f32 %v780, %v1549
  %v1599 = vmax.f32 %v781, %v1550
  %v1600 = vmax.f32 %v782, %v1551
  %v1601 = vmax.f32 %v783, %v1552
  %v1602 = vmax.f32 %v784, %v1553
  %v1603 = vmax.f32 %v785, %v1554
  %v1604 = vmax.f32 %v786, %v1555
  %v1605 = vmax.f32 %v787, %v1556
  %v1606 = vmax.f32 %v788, %v1557
  %v1607 = vmax.f32 %v789, %v1558
  %v1608 = vmax.f32 %v790, %v1559
  %v1609 = vmax.f32 %v791, %v1560
  %v1610 = vmax.f32 %v792, %v1561
  %v1611 = vmax.f32 %v793, %v1562
  %v1612 = vmax.f32 %v794, %v1563
  %v1613 = vmax.f32 %v795, %v1564
  %v1614 = vmax.f32 %v796, %v1565
  %v1615 = vmax.f32 %v797, %v1566
  %v1616 = vmax.f32 %v798, %v1567
  %v1617 = vmax.f32 %v799, %v1568
  %v1618 = vmax.f32 %v800, %v1569
  %v1619 = vld [vmem:[%s5] sm:$0x1]
  %v1621 = vperm.slane %v1619, 0
  %v1623 = vadd.f32 %v1570, %v1621
  %v1624 = vadd.f32 %v1571, %v1621
  %v1625 = vadd.f32 %v1572, %v1621
  %v1626 = vadd.f32 %v1573, %v1621
  %v1627 = vadd.f32 %v1574, %v1621
  %v1628 = vadd.f32 %v1575, %v1621
  %v1629 = vadd.f32 %v1576, %v1621
  %v1630 = vadd.f32 %v1577, %v1621
  %v1631 = vadd.f32 %v1578, %v1621
  %v1632 = vadd.f32 %v1579, %v1621
  %v1633 = vadd.f32 %v1580, %v1621
  %v1634 = vadd.f32 %v1581, %v1621
  %v1635 = vadd.f32 %v1582, %v1621
  %v1636 = vadd.f32 %v1583, %v1621
  %v1637 = vadd.f32 %v1584, %v1621
  %v1638 = vadd.f32 %v1585, %v1621
  %v1639 = vadd.f32 %v1586, %v1621
  %v1640 = vadd.f32 %v1587, %v1621
  %v1641 = vadd.f32 %v1588, %v1621
  %v1642 = vadd.f32 %v1589, %v1621
  %v1643 = vadd.f32 %v1590, %v1621
  %v1644 = vadd.f32 %v1591, %v1621
  %v1645 = vadd.f32 %v1592, %v1621
  %v1646 = vadd.f32 %v1593, %v1621
  %v1647 = vadd.f32 %v1594, %v1621
  %v1648 = vadd.f32 %v1595, %v1621
  %v1649 = vadd.f32 %v1596, %v1621
  %v1650 = vadd.f32 %v1597, %v1621
  %v1651 = vadd.f32 %v1598, %v1621
  %v1652 = vadd.f32 %v1599, %v1621
  %v1653 = vadd.f32 %v1600, %v1621
  %v1654 = vadd.f32 %v1601, %v1621
  %v1655 = vadd.f32 %v1602, %v1621
  %v1656 = vadd.f32 %v1603, %v1621
  %v1657 = vadd.f32 %v1604, %v1621
  %v1658 = vadd.f32 %v1605, %v1621
  %v1659 = vadd.f32 %v1606, %v1621
  %v1660 = vadd.f32 %v1607, %v1621
  %v1661 = vadd.f32 %v1608, %v1621
  %v1662 = vadd.f32 %v1609, %v1621
  %v1663 = vadd.f32 %v1610, %v1621
  %v1664 = vadd.f32 %v1611, %v1621
  %v1665 = vadd.f32 %v1612, %v1621
  %v1666 = vadd.f32 %v1613, %v1621
  %v1667 = vadd.f32 %v1614, %v1621
  %v1668 = vadd.f32 %v1615, %v1621
  %v1669 = vadd.f32 %v1616, %v1621
  %v1670 = vadd.f32 %v1617, %v1621
  %v1671 = vadd.f32 %v1618, %v1621
  %v1672 = vmax.f32 %v1623, 0.0
  %v1673 = vmax.f32 %v1624, 0.0
  %v1674 = vmax.f32 %v1625, 0.0
  %v1675 = vmax.f32 %v1626, 0.0
  %v1676 = vmax.f32 %v1627, 0.0
  %v1677 = vmax.f32 %v1628, 0.0
  %v1678 = vmax.f32 %v1629, 0.0
  %v1679 = vmax.f32 %v1630, 0.0
  %v1680 = vmax.f32 %v1631, 0.0
  %v1681 = vmax.f32 %v1632, 0.0
  %v1682 = vmax.f32 %v1633, 0.0
  %v1683 = vmax.f32 %v1634, 0.0
  %v1684 = vmax.f32 %v1635, 0.0
  %v1685 = vmax.f32 %v1636, 0.0
  %v1686 = vmax.f32 %v1637, 0.0
  %v1687 = vmax.f32 %v1638, 0.0
  %v1688 = vmax.f32 %v1639, 0.0
  %v1689 = vmax.f32 %v1640, 0.0
  %v1690 = vmax.f32 %v1641, 0.0
  %v1691 = vmax.f32 %v1642, 0.0
  %v1692 = vmax.f32 %v1643, 0.0
  %v1693 = vmax.f32 %v1644, 0.0
  %v1694 = vmax.f32 %v1645, 0.0
  %v1695 = vmax.f32 %v1646, 0.0
  %v1696 = vmax.f32 %v1647, 0.0
  %v1697 = vmax.f32 %v1648, 0.0
  %v1698 = vmax.f32 %v1649, 0.0
  %v1699 = vmax.f32 %v1650, 0.0
  %v1700 = vmax.f32 %v1651, 0.0
  %v1701 = vmax.f32 %v1652, 0.0
  %v1702 = vmax.f32 %v1653, 0.0
  %v1703 = vmax.f32 %v1654, 0.0
  %v1704 = vmax.f32 %v1655, 0.0
  %v1705 = vmax.f32 %v1656, 0.0
  %v1706 = vmax.f32 %v1657, 0.0
  %v1707 = vmax.f32 %v1658, 0.0
  %v1708 = vmax.f32 %v1659, 0.0
  %v1709 = vmax.f32 %v1660, 0.0
  %v1710 = vmax.f32 %v1661, 0.0
  %v1711 = vmax.f32 %v1662, 0.0
  %v1712 = vmax.f32 %v1663, 0.0
  %v1713 = vmax.f32 %v1664, 0.0
  %v1714 = vmax.f32 %v1665, 0.0
  %v1715 = vmax.f32 %v1666, 0.0
  %v1716 = vmax.f32 %v1667, 0.0
  %v1717 = vmax.f32 %v1668, 0.0
  %v1718 = vmax.f32 %v1669, 0.0
  %v1719 = vmax.f32 %v1670, 0.0
  %v1720 = vmax.f32 %v1671, 0.0
  %vm1721 = vcmask 80896
  %1722 = vst.msk [vmem:[%s6] sm:$0xff] %vm1721, %v1672
  %1723 = vst.msk [vmem:[%s6 + $0x8] sm:$0xff] %vm1721, %v1673
  %1724 = vst.msk [vmem:[%s6 + $0x10] sm:$0xff] %vm1721, %v1674
  %1725 = vst.msk [vmem:[%s6 + $0x18] sm:$0xff] %vm1721, %v1675
  %1726 = vst.msk [vmem:[%s6 + $0x20] sm:$0xff] %vm1721, %v1676
  %1727 = vst.msk [vmem:[%s6 + $0x28] sm:$0xff] %vm1721, %v1677
  %1728 = vst.msk [vmem:[%s6 + $0x30] sm:$0xff] %vm1721, %v1678
  %1729 = vst.msk [vmem:[%s6 + $0x38] sm:$0xff] %vm1721, %v1679
  %1730 = vst.msk [vmem:[%s6 + $0x40] sm:$0xff] %vm1721, %v1680
  %1731 = vst.msk [vmem:[%s6 + $0x48] sm:$0xff] %vm1721, %v1681
  %1732 = vst.msk [vmem:[%s6 + $0x50] sm:$0xff] %vm1721, %v1682
  %1733 = vst.msk [vmem:[%s6 + $0x58] sm:$0xff] %vm1721, %v1683
  %1734 = vst.msk [vmem:[%s6 + $0x60] sm:$0xff] %vm1721, %v1684
  %1735 = vst.msk [vmem:[%s6 + $0x68] sm:$0xff] %vm1721, %v1685
  %1736 = vst.msk [vmem:[%s6 + $0x70] sm:$0xff] %vm1721, %v1686
  %1737 = vst.msk [vmem:[%s6 + $0x78] sm:$0xff] %vm1721, %v1687
  %1738 = vst.msk [vmem:[%s6 + $0x80] sm:$0xff] %vm1721, %v1688
  %1739 = vst.msk [vmem:[%s6 + $0x88] sm:$0xff] %vm1721, %v1689
  %1740 = vst.msk [vmem:[%s6 + $0x90] sm:$0xff] %vm1721, %v1690
  %1741 = vst.msk [vmem:[%s6 + $0x98] sm:$0xff] %vm1721, %v1691
  %1742 = vst.msk [vmem:[%s6 + $0xa0] sm:$0xff] %vm1721, %v1692
  %1743 = vst.msk [vmem:[%s6 + $0xa8] sm:$0xff] %vm1721, %v1693
  %1744 = vst.msk [vmem:[%s6 + $0xb0] sm:$0xff] %vm1721, %v1694
  %1745 = vst.msk [vmem:[%s6 + $0xb8] sm:$0xff] %vm1721, %v1695
  %1746 = vst.msk [vmem:[%s6 + $0xc0] sm:$0xff] %vm1721, %v1696
  %1747 = vst.msk [vmem:[%s6 + $0xc8] sm:$0xff] %vm1721, %v1697
  %1748 = vst.msk [vmem:[%s6 + $0xd0] sm:$0xff] %vm1721, %v1698
  %1749 = vst.msk [vmem:[%s6 + $0xd8] sm:$0xff] %vm1721, %v1699
  %1750 = vst.msk [vmem:[%s6 + $0xe0] sm:$0xff] %vm1721, %v1700
  %1751 = vst.msk [vmem:[%s6 + $0xe8] sm:$0xff] %vm1721, %v1701
  %1752 = vst.msk [vmem:[%s6 + $0xf0] sm:$0xff] %vm1721, %v1702
  %1753 = vst.msk [vmem:[%s6 + $0xf8] sm:$0xff] %vm1721, %v1703
  %1754 = vst.msk [vmem:[%s6 + $0x100] sm:$0xff] %vm1721, %v1704
  %1755 = vst.msk [vmem:[%s6 + $0x108] sm:$0xff] %vm1721, %v1705
  %1756 = vst.msk [vmem:[%s6 + $0x110] sm:$0xff] %vm1721, %v1706
  %1757 = vst.msk [vmem:[%s6 + $0x118] sm:$0xff] %vm1721, %v1707
  %1758 = vst.msk [vmem:[%s6 + $0x120] sm:$0xff] %vm1721, %v1708
  %1759 = vst.msk [vmem:[%s6 + $0x128] sm:$0xff] %vm1721, %v1709
  %1760 = vst.msk [vmem:[%s6 + $0x130] sm:$0xff] %vm1721, %v1710
  %1761 = vst.msk [vmem:[%s6 + $0x138] sm:$0xff] %vm1721, %v1711
  %1762 = vst.msk [vmem:[%s6 + $0x140] sm:$0xff] %vm1721, %v1712
  %1763 = vst.msk [vmem:[%s6 + $0x148] sm:$0xff] %vm1721, %v1713
  %1764 = vst.msk [vmem:[%s6 + $0x150] sm:$0xff] %vm1721, %v1714
  %1765 = vst.msk [vmem:[%s6 + $0x158] sm:$0xff] %vm1721, %v1715
  %1766 = vst.msk [vmem:[%s6 + $0x160] sm:$0xff] %vm1721, %v1716
  %1767 = vst.msk [vmem:[%s6 + $0x168] sm:$0xff] %vm1721, %v1717
  %1768 = vst.msk [vmem:[%s6 + $0x170] sm:$0xff] %vm1721, %v1718
  %1769 = vst.msk [vmem:[%s6 + $0x178] sm:$0xff] %vm1721, %v1719
  %1770 = vst.msk [vmem:[%s6 + $0x180] sm:$0xff] %vm1721, %v1720
  // Predicated region
  $region26: #{mnist_classifier_forward.3} parent=0 // pred_check
    _
  $region27: #{mnist_classifier_forward.3} parent=0 // pred_check_branch
    %1772 = sbr.rel (0) target = $region29
  $region28: #{mnist_classifier_forward.3} parent=0 // pred_region
    _
  $region29: #{mnist_classifier_forward.3} parent=0 // pred_fallthru
    _
  // Predicated region
  $region30: #{mnist_classifier_forward.3} parent=0 // pred_check
    _
  $region31: #{mnist_classifier_forward.3} parent=0 // pred_check_branch
    %1774 = sbr.rel (0) target = $region33
  $region32: #{mnist_classifier_forward.3} parent=0 // pred_region
    _
  $region33: #{mnist_classifier_forward.3} parent=0 // pred_fallthru
    _

// kernel: mnist_classifier_forward.4
$region0: #{mnist_classifier_forward.4}
  #allocation0 [shape = 'u32[]', space=smem, size = 0x4, offset = 0x4, fixed_abs, tag = 'smem constant byte address 0x4 - core index']
  #allocation1 [shape = 'u32[72,128]{1,0:T(1,128)}', space=vmem, size = 0x9000, scoped, tag = 'internal scratch']
  %s0 = inlined_call_operand.vmem [shape: f32[98,250], index: 0, kind: input, shape index: {}]
  %s1 = inlined_call_operand.vmem [shape: f32[98,250], index: 1, kind: input, shape index: {}]
  %s2 = inlined_call_operand.vmem [shape: f32[98,250], index: 2, kind: input, shape index: {}]
  %s3 = inlined_call_operand.vmem [shape: f32[98,250], index: 3, kind: input, shape index: {}]
  %s4 = inlined_call_operand.vmem [shape: f32[250,32], index: 4, kind: input, shape index: {}]
  %s5 = inlined_call_operand.vmem [shape: f32[1,32], index: 5, kind: input, shape index: {}]
  %s6 = inlined_call_operand.vmem [shape: f32[98,32], index: 6, kind: output, shape index: {}]
  %s7 = sld [smem:[#allocation0]]
  $region34: #{mnist_classifier_forward.4} parent=0
    _
  %s9 = ssub.s32 1, %s7
  %s10 = scalar_select 0, %s9, %s7
  // Predicated region
  $region2: #{mnist_classifier_forward.4} parent=0 // pred_check
    _
  $region3: #{mnist_classifier_forward.4} parent=0 // pred_check_branch
    %12 = sbr.rel (0) target = $region5
  $region4: #{mnist_classifier_forward.4} parent=0 // pred_region
    _
  $region5: #{mnist_classifier_forward.4} parent=0 // pred_fallthru
    _
  // Predicated region
  $region6: #{mnist_classifier_forward.4} parent=0 // pred_check
    _
  $region7: #{mnist_classifier_forward.4} parent=0 // pred_check_branch
    %14 = sbr.rel (0) target = $region9
  $region8: #{mnist_classifier_forward.4} parent=0 // pred_region
    _
  $region9: #{mnist_classifier_forward.4} parent=0 // pred_fallthru
    _
  // Predicated region
  $region10: #{mnist_classifier_forward.4} parent=0 // pred_check
    _
  $region11: #{mnist_classifier_forward.4} parent=0 // pred_check_branch
    %16 = sbr.rel (0) target = $region13
  $region12: #{mnist_classifier_forward.4} parent=0 // pred_region
    _
  $region13: #{mnist_classifier_forward.4} parent=0 // pred_fallthru
    _
  // Predicated region
  $region14: #{mnist_classifier_forward.4} parent=0 // pred_check
    _
  $region15: #{mnist_classifier_forward.4} parent=0 // pred_check_branch
    %18 = sbr.rel (0) target = $region17
  $region16: #{mnist_classifier_forward.4} parent=0 // pred_region
    _
  $region17: #{mnist_classifier_forward.4} parent=0 // pred_fallthru
    _
  // Predicated region
  $region18: #{mnist_classifier_forward.4} parent=0 // pred_check
    _
  $region19: #{mnist_classifier_forward.4} parent=0 // pred_check_branch
    %20 = sbr.rel (0) target = $region21
  $region20: #{mnist_classifier_forward.4} parent=0 // pred_region
    _
  $region21: #{mnist_classifier_forward.4} parent=0 // pred_fallthru
    _
  // Predicated region
  $region22: #{mnist_classifier_forward.4} parent=0 // pred_check
    _
  $region23: #{mnist_classifier_forward.4} parent=0 // pred_check_branch
    %22 = sbr.rel (0) target = $region25
  $region24: #{mnist_classifier_forward.4} parent=0 // pred_region
    _
  $region25: #{mnist_classifier_forward.4} parent=0 // pred_fallthru
    _
  %v23 = vld [vmem:[%s4] sm:$0xff]
  %v24 = vld [vmem:[%s4 + $0x8] sm:$0xff]
  %v25 = vld [vmem:[%s4 + $0x10] sm:$0xff]
  %v26 = vld [vmem:[%s4 + $0x18] sm:$0xff]
  %v27 = vld [vmem:[%s4 + $0x20] sm:$0xff]
  %v28 = vld [vmem:[%s4 + $0x28] sm:$0xff]
  %v29 = vld [vmem:[%s4 + $0x30] sm:$0xff]
  %v30 = vld [vmem:[%s4 + $0x38] sm:$0xff]
  %v31 = vld [vmem:[%s4 + $0x40] sm:$0xff]
  %v32 = vld [vmem:[%s4 + $0x48] sm:$0xff]
  %v33 = vld [vmem:[%s4 + $0x50] sm:$0xff]
  %v34 = vld [vmem:[%s4 + $0x58] sm:$0xff]
  %v35 = vld [vmem:[%s4 + $0x60] sm:$0xff]
  %v36 = vld [vmem:[%s4 + $0x68] sm:$0xff]
  %v37 = vld [vmem:[%s4 + $0x70] sm:$0xff]
  %v38 = vld [vmem:[%s4 + $0x78] sm:$0xff]
  %v39 = vld [vmem:[%s4 + $0x80] sm:$0xff]
  %v40 = vld [vmem:[%s4 + $0x88] sm:$0xff]
  %v41 = vld [vmem:[%s4 + $0x90] sm:$0xff]
  %v42 = vld [vmem:[%s4 + $0x98] sm:$0xff]
  %v43 = vld [vmem:[%s4 + $0xa0] sm:$0xff]
  %v44 = vld [vmem:[%s4 + $0xa8] sm:$0xff]
  %v45 = vld [vmem:[%s4 + $0xb0] sm:$0xff]
  %v46 = vld [vmem:[%s4 + $0xb8] sm:$0xff]
  %v47 = vld [vmem:[%s4 + $0xc0] sm:$0xff]
  %v48 = vld [vmem:[%s4 + $0xc8] sm:$0xff]
  %v49 = vld [vmem:[%s4 + $0xd0] sm:$0xff]
  %v50 = vld [vmem:[%s4 + $0xd8] sm:$0xff]
  %v51 = vld [vmem:[%s4 + $0xe0] sm:$0xff]
  %v52 = vld [vmem:[%s4 + $0xe8] sm:$0xff]
  %v53 = vld [vmem:[%s4 + $0xf0] sm:$0xff]
  %v54 = vld [vmem:[%s4 + $0xf8] sm:$0x3]
  %v55 = vld [vmem:[%s0] sm:$0xff]
  %v56 = vld [vmem:[%s0 + $0x8] sm:$0xff]
  %v57 = vld [vmem:[%s0 + $0x10] sm:$0xff]
  %v58 = vld [vmem:[%s0 + $0x18] sm:$0xff]
  %v59 = vld [vmem:[%s0 + $0x20] sm:$0xff]
  %v60 = vld [vmem:[%s0 + $0x28] sm:$0xff]
  %v61 = vld [vmem:[%s0 + $0x30] sm:$0xff]
  %v62 = vld [vmem:[%s0 + $0x38] sm:$0xff]
  %v63 = vld [vmem:[%s0 + $0x40] sm:$0xff]
  %v64 = vld [vmem:[%s0 + $0x48] sm:$0xff]
  %v65 = vld [vmem:[%s0 + $0x50] sm:$0xff]
  %v66 = vld [vmem:[%s0 + $0x58] sm:$0xff]
  %v67 = vld [vmem:[%s0 + $0x60] sm:$0xff]
  %v68 = vld [vmem:[%s0 + $0x68] sm:$0xff]
  %v69 = vld [vmem:[%s0 + $0x70] sm:$0xff]
  %v70 = vld [vmem:[%s0 + $0x78] sm:$0xff]
  %v71 = vld [vmem:[%s0 + $0x80] sm:$0xff]
  %v72 = vld [vmem:[%s0 + $0x88] sm:$0xff]
  %v73 = vld [vmem:[%s0 + $0x90] sm:$0xff]
  %v74 = vld [vmem:[%s0 + $0x98] sm:$0xff]
  %v75 = vld [vmem:[%s0 + $0xa0] sm:$0xff]
  %v76 = vld [vmem:[%s0 + $0xa8] sm:$0xff]
  %v77 = vld [vmem:[%s0 + $0xb0] sm:$0xff]
  %v78 = vld [vmem:[%s0 + $0xb8] sm:$0xff]
  %v79 = vld [vmem:[%s0 + $0xc0] sm:$0x3]
  %v80 = vld [vmem:[%s0 + $0xc8] sm:$0x3]
  %vm81 = vcmask 998400
  %v83 = vsel %vm81, %v56, 0
  %v86 = vsel %vm81, %v58, 0
  %v89 = vsel %vm81, %v60, 0
  %v92 = vsel %vm81, %v62, 0
  %v95 = vsel %vm81, %v64, 0
  %v98 = vsel %vm81, %v66, 0
  %v101 = vsel %vm81, %v68, 0
  %v104 = vsel %vm81, %v70, 0
  %v107 = vsel %vm81, %v72, 0
  %v110 = vsel %vm81, %v74, 0
  %v113 = vsel %vm81, %v76, 0
  %v116 = vsel %vm81, %v78, 0
  %v119 = vsel %vm81, %v80, 0
  %vm121 = vcmask 1041408
  %v123 = vsel %vm121, %v54, 0
  %125 = vmatpush.msra.mxu0 %v38
  %126 = vmatpush.msra.mxu0 %v37
  %127 = vmatpush.msra.mxu0 %v36
  %128 = vmatpush.msra.mxu0 %v35
  %129 = vmatpush.msra.mxu0 %v34
  %130 = vmatpush.msra.mxu0 %v33
  %131 = vmatpush.msra.mxu0 %v32
  %132 = vmatpush.msra.mxu0 %v31
  %133 = vmatpush.msra.mxu0 %v30
  %134 = vmatpush.msra.mxu0 %v29
  %135 = vmatpush.msra.mxu0 %v28
  %136 = vmatpush.msra.mxu0 %v27
  %137 = vmatpush.msra.mxu0 %v26
  %138 = vmatpush.msra.mxu0 %v25
  %139 = vmatpush.msra.mxu0 %v24
  %140 = vmatpush.msra.mxu0 %v23
  %141 = vmatmul.f32.gmra.mxu0 %v55
  %v142 = vpop.f32.mrf.mxu0
  %v143 = vadd.f32 0.0, %v142
  %144 = vmatmul.f32.gmra.mxu0 %v57
  %v145 = vpop.f32.mrf.mxu0
  %v146 = vadd.f32 0.0, %v145
  %147 = vmatmul.f32.gmra.mxu0 %v59
  %v148 = vpop.f32.mrf.mxu0
  %v149 = vadd.f32 0.0, %v148
  %150 = vmatmul.f32.gmra.mxu0 %v61
  %v151 = vpop.f32.mrf.mxu0
  %v152 = vadd.f32 0.0, %v151
  %153 = vmatmul.f32.gmra.mxu0 %v63
  %v154 = vpop.f32.mrf.mxu0
  %v155 = vadd.f32 0.0, %v154
  %156 = vmatmul.f32.gmra.mxu0 %v65
  %v157 = vpop.f32.mrf.mxu0
  %v158 = vadd.f32 0.0, %v157
  %159 = vmatmul.f32.gmra.mxu0 %v67
  %v160 = vpop.f32.mrf.mxu0
  %v161 = vadd.f32 0.0, %v160
  %162 = vmatmul.f32.gmra.mxu0 %v69
  %v163 = vpop.f32.mrf.mxu0
  %v164 = vadd.f32 0.0, %v163
  %165 = vmatmul.f32.gmra.mxu0 %v71
  %v166 = vpop.f32.mrf.mxu0
  %v167 = vadd.f32 0.0, %v166
  %168 = vmatmul.f32.gmra.mxu0 %v73
  %v169 = vpop.f32.mrf.mxu0
  %v170 = vadd.f32 0.0, %v169
  %171 = vmatmul.f32.gmra.mxu0 %v75
  %v172 = vpop.f32.mrf.mxu0
  %v173 = vadd.f32 0.0, %v172
  %174 = vmatmul.f32.gmra.mxu0 %v77
  %v175 = vpop.f32.mrf.mxu0
  %v176 = vadd.f32 0.0, %v175
  %177 = vmatmul.f32.gmra.mxu0 %v79
  %v178 = vpop.f32.mrf.mxu0
  %v179 = vadd.f32 0.0, %v178
  %180 = vdwg.mxu0
  %181 = vmatpush.msra.mxu0 %v123
  %182 = vmatpush.msra.mxu0 %v53
  %183 = vmatpush.msra.mxu0 %v52
  %184 = vmatpush.msra.mxu0 %v51
  %185 = vmatpush.msra.mxu0 %v50
  %186 = vmatpush.msra.mxu0 %v49
  %187 = vmatpush.msra.mxu0 %v48
  %188 = vmatpush.msra.mxu0 %v47
  %189 = vmatpush.msra.mxu0 %v46
  %190 = vmatpush.msra.mxu0 %v45
  %191 = vmatpush.msra.mxu0 %v44
  %192 = vmatpush.msra.mxu0 %v43
  %193 = vmatpush.msra.mxu0 %v42
  %194 = vmatpush.msra.mxu0 %v41
  %195 = vmatpush.msra.mxu0 %v40
  %196 = vmatpush.msra.mxu0 %v39
  %197 = vmatmul.f32.gmra.mxu0 %v83
  %v198 = vpop.f32.mrf.mxu0
  %v199 = vadd.f32 %v143, %v198
  %200 = vmatmul.f32.gmra.mxu0 %v86
  %v201 = vpop.f32.mrf.mxu0
  %v202 = vadd.f32 %v146, %v201
  %203 = vmatmul.f32.gmra.mxu0 %v89
  %v204 = vpop.f32.mrf.mxu0
  %v205 = vadd.f32 %v149, %v204
  %206 = vmatmul.f32.gmra.mxu0 %v92
  %v207 = vpop.f32.mrf.mxu0
  %v208 = vadd.f32 %v152, %v207
  %209 = vmatmul.f32.gmra.mxu0 %v95
  %v210 = vpop.f32.mrf.mxu0
  %v211 = vadd.f32 %v155, %v210
  %212 = vmatmul.f32.gmra.mxu0 %v98
  %v213 = vpop.f32.mrf.mxu0
  %v214 = vadd.f32 %v158, %v213
  %215 = vmatmul.f32.gmra.mxu0 %v101
  %v216 = vpop.f32.mrf.mxu0
  %v217 = vadd.f32 %v161, %v216
  %218 = vmatmul.f32.gmra.mxu0 %v104
  %v219 = vpop.f32.mrf.mxu0
  %v220 = vadd.f32 %v164, %v219
  %221 = vmatmul.f32.gmra.mxu0 %v107
  %v222 = vpop.f32.mrf.mxu0
  %v223 = vadd.f32 %v167, %v222
  %224 = vmatmul.f32.gmra.mxu0 %v110
  %v225 = vpop.f32.mrf.mxu0
  %v226 = vadd.f32 %v170, %v225
  %227 = vmatmul.f32.gmra.mxu0 %v113
  %v228 = vpop.f32.mrf.mxu0
  %v229 = vadd.f32 %v173, %v228
  %230 = vmatmul.f32.gmra.mxu0 %v116
  %v231 = vpop.f32.mrf.mxu0
  %v232 = vadd.f32 %v176, %v231
  %233 = vmatmul.f32.gmra.mxu0 %v119
  %v234 = vpop.f32.mrf.mxu0
  %v235 = vadd.f32 %v179, %v234
  %236 = vdwg.mxu0
  %v237 = vld [vmem:[%s1] sm:$0xff]
  %v238 = vld [vmem:[%s1 + $0x8] sm:$0xff]
  %v239 = vld [vmem:[%s1 + $0x10] sm:$0xff]
  %v240 = vld [vmem:[%s1 + $0x18] sm:$0xff]
  %v241 = vld [vmem:[%s1 + $0x20] sm:$0xff]
  %v242 = vld [vmem:[%s1 + $0x28] sm:$0xff]
  %v243 = vld [vmem:[%s1 + $0x30] sm:$0xff]
  %v244 = vld [vmem:[%s1 + $0x38] sm:$0xff]
  %v245 = vld [vmem:[%s1 + $0x40] sm:$0xff]
  %v246 = vld [vmem:[%s1 + $0x48] sm:$0xff]
  %v247 = vld [vmem:[%s1 + $0x50] sm:$0xff]
  %v248 = vld [vmem:[%s1 + $0x58] sm:$0xff]
  %v249 = vld [vmem:[%s1 + $0x60] sm:$0xff]
  %v250 = vld [vmem:[%s1 + $0x68] sm:$0xff]
  %v251 = vld [vmem:[%s1 + $0x70] sm:$0xff]
  %v252 = vld [vmem:[%s1 + $0x78] sm:$0xff]
  %v253 = vld [vmem:[%s1 + $0x80] sm:$0xff]
  %v254 = vld [vmem:[%s1 + $0x88] sm:$0xff]
  %v255 = vld [vmem:[%s1 + $0x90] sm:$0xff]
  %v256 = vld [vmem:[%s1 + $0x98] sm:$0xff]
  %v257 = vld [vmem:[%s1 + $0xa0] sm:$0xff]
  %v258 = vld [vmem:[%s1 + $0xa8] sm:$0xff]
  %v259 = vld [vmem:[%s1 + $0xb0] sm:$0xff]
  %v260 = vld [vmem:[%s1 + $0xb8] sm:$0xff]
  %v261 = vld [vmem:[%s1 + $0xc0] sm:$0x3]
  %v262 = vld [vmem:[%s1 + $0xc8] sm:$0x3]
  %v264 = vsel %vm81, %v238, 0
  %v267 = vsel %vm81, %v240, 0
  %v270 = vsel %vm81, %v242, 0
  %v273 = vsel %vm81, %v244, 0
  %v276 = vsel %vm81, %v246, 0
  %v279 = vsel %vm81, %v248, 0
  %v282 = vsel %vm81, %v250, 0
  %v285 = vsel %vm81, %v252, 0
  %v288 = vsel %vm81, %v254, 0
  %v291 = vsel %vm81, %v256, 0
  %v294 = vsel %vm81, %v258, 0
  %v297 = vsel %vm81, %v260, 0
  %v300 = vsel %vm81, %v262, 0
  %302 = vmatpush.msra.mxu0 %v38
  %303 = vmatpush.msra.mxu0 %v37
  %304 = vmatpush.msra.mxu0 %v36
  %305 = vmatpush.msra.mxu0 %v35
  %306 = vmatpush.msra.mxu0 %v34
  %307 = vmatpush.msra.mxu0 %v33
  %308 = vmatpush.msra.mxu0 %v32
  %309 = vmatpush.msra.mxu0 %v31
  %310 = vmatpush.msra.mxu0 %v30
  %311 = vmatpush.msra.mxu0 %v29
  %312 = vmatpush.msra.mxu0 %v28
  %313 = vmatpush.msra.mxu0 %v27
  %314 = vmatpush.msra.mxu0 %v26
  %315 = vmatpush.msra.mxu0 %v25
  %316 = vmatpush.msra.mxu0 %v24
  %317 = vmatpush.msra.mxu0 %v23
  %318 = vmatmul.f32.gmra.mxu0 %v237
  %v319 = vpop.f32.mrf.mxu0
  %v320 = vadd.f32 0.0, %v319
  %321 = vmatmul.f32.gmra.mxu0 %v239
  %v322 = vpop.f32.mrf.mxu0
  %v323 = vadd.f32 0.0, %v322
  %324 = vmatmul.f32.gmra.mxu0 %v241
  %v325 = vpop.f32.mrf.mxu0
  %v326 = vadd.f32 0.0, %v325
  %327 = vmatmul.f32.gmra.mxu0 %v243
  %v328 = vpop.f32.mrf.mxu0
  %v329 = vadd.f32 0.0, %v328
  %330 = vmatmul.f32.gmra.mxu0 %v245
  %v331 = vpop.f32.mrf.mxu0
  %v332 = vadd.f32 0.0, %v331
  %333 = vmatmul.f32.gmra.mxu0 %v247
  %v334 = vpop.f32.mrf.mxu0
  %v335 = vadd.f32 0.0, %v334
  %336 = vmatmul.f32.gmra.mxu0 %v249
  %v337 = vpop.f32.mrf.mxu0
  %v338 = vadd.f32 0.0, %v337
  %339 = vmatmul.f32.gmra.mxu0 %v251
  %v340 = vpop.f32.mrf.mxu0
  %v341 = vadd.f32 0.0, %v340
  %342 = vmatmul.f32.gmra.mxu0 %v253
  %v343 = vpop.f32.mrf.mxu0
  %v344 = vadd.f32 0.0, %v343
  %345 = vmatmul.f32.gmra.mxu0 %v255
  %v346 = vpop.f32.mrf.mxu0
  %v347 = vadd.f32 0.0, %v346
  %348 = vmatmul.f32.gmra.mxu0 %v257
  %v349 = vpop.f32.mrf.mxu0
  %v350 = vadd.f32 0.0, %v349
  %351 = vmatmul.f32.gmra.mxu0 %v259
  %v352 = vpop.f32.mrf.mxu0
  %v353 = vadd.f32 0.0, %v352
  %354 = vmatmul.f32.gmra.mxu0 %v261
  %v355 = vpop.f32.mrf.mxu0
  %v356 = vadd.f32 0.0, %v355
  %357 = vdwg.mxu0
  %358 = vmatpush.msra.mxu0 %v123
  %359 = vmatpush.msra.mxu0 %v53
  %360 = vmatpush.msra.mxu0 %v52
  %361 = vmatpush.msra.mxu0 %v51
  %362 = vmatpush.msra.mxu0 %v50
  %363 = vmatpush.msra.mxu0 %v49
  %364 = vmatpush.msra.mxu0 %v48
  %365 = vmatpush.msra.mxu0 %v47
  %366 = vmatpush.msra.mxu0 %v46
  %367 = vmatpush.msra.mxu0 %v45
  %368 = vmatpush.msra.mxu0 %v44
  %369 = vmatpush.msra.mxu0 %v43
  %370 = vmatpush.msra.mxu0 %v42
  %371 = vmatpush.msra.mxu0 %v41
  %372 = vmatpush.msra.mxu0 %v40
  %373 = vmatpush.msra.mxu0 %v39
  %374 = vmatmul.f32.gmra.mxu0 %v264
  %v375 = vpop.f32.mrf.mxu0
  %v376 = vadd.f32 %v320, %v375
  %377 = vmatmul.f32.gmra.mxu0 %v267
  %v378 = vpop.f32.mrf.mxu0
  %v379 = vadd.f32 %v323, %v378
  %380 = vmatmul.f32.gmra.mxu0 %v270
  %v381 = vpop.f32.mrf.mxu0
  %v382 = vadd.f32 %v326, %v381
  %383 = vmatmul.f32.gmra.mxu0 %v273
  %v384 = vpop.f32.mrf.mxu0
  %v385 = vadd.f32 %v329, %v384
  %386 = vmatmul.f32.gmra.mxu0 %v276
  %v387 = vpop.f32.mrf.mxu0
  %v388 = vadd.f32 %v332, %v387
  %389 = vmatmul.f32.gmra.mxu0 %v279
  %v390 = vpop.f32.mrf.mxu0
  %v391 = vadd.f32 %v335, %v390
  %392 = vmatmul.f32.gmra.mxu0 %v282
  %v393 = vpop.f32.mrf.mxu0
  %v394 = vadd.f32 %v338, %v393
  %395 = vmatmul.f32.gmra.mxu0 %v285
  %v396 = vpop.f32.mrf.mxu0
  %v397 = vadd.f32 %v341, %v396
  %398 = vmatmul.f32.gmra.mxu0 %v288
  %v399 = vpop.f32.mrf.mxu0
  %v400 = vadd.f32 %v344, %v399
  %401 = vmatmul.f32.gmra.mxu0 %v291
  %v402 = vpop.f32.mrf.mxu0
  %v403 = vadd.f32 %v347, %v402
  %404 = vmatmul.f32.gmra.mxu0 %v294
  %v405 = vpop.f32.mrf.mxu0
  %v406 = vadd.f32 %v350, %v405
  %407 = vmatmul.f32.gmra.mxu0 %v297
  %v408 = vpop.f32.mrf.mxu0
  %v409 = vadd.f32 %v353, %v408
  %410 = vmatmul.f32.gmra.mxu0 %v300
  %v411 = vpop.f32.mrf.mxu0
  %v412 = vadd.f32 %v356, %v411
  %413 = vdwg.mxu0
  %v414 = vmax.f32 %v199, %v376
  %v415 = vmax.f32 %v202, %v379
  %v416 = vmax.f32 %v205, %v382
  %v417 = vmax.f32 %v208, %v385
  %v418 = vmax.f32 %v211, %v388
  %v419 = vmax.f32 %v214, %v391
  %v420 = vmax.f32 %v217, %v394
  %v421 = vmax.f32 %v220, %v397
  %v422 = vmax.f32 %v223, %v400
  %v423 = vmax.f32 %v226, %v403
  %v424 = vmax.f32 %v229, %v406
  %v425 = vmax.f32 %v232, %v409
  %v426 = vmax.f32 %v235, %v412
  %v427 = vld [vmem:[%s2] sm:$0xff]
  %v428 = vld [vmem:[%s2 + $0x8] sm:$0xff]
  %v429 = vld [vmem:[%s2 + $0x10] sm:$0xff]
  %v430 = vld [vmem:[%s2 + $0x18] sm:$0xff]
  %v431 = vld [vmem:[%s2 + $0x20] sm:$0xff]
  %v432 = vld [vmem:[%s2 + $0x28] sm:$0xff]
  %v433 = vld [vmem:[%s2 + $0x30] sm:$0xff]
  %v434 = vld [vmem:[%s2 + $0x38] sm:$0xff]
  %v435 = vld [vmem:[%s2 + $0x40] sm:$0xff]
  %v436 = vld [vmem:[%s2 + $0x48] sm:$0xff]
  %v437 = vld [vmem:[%s2 + $0x50] sm:$0xff]
  %v438 = vld [vmem:[%s2 + $0x58] sm:$0xff]
  %v439 = vld [vmem:[%s2 + $0x60] sm:$0xff]
  %v440 = vld [vmem:[%s2 + $0x68] sm:$0xff]
  %v441 = vld [vmem:[%s2 + $0x70] sm:$0xff]
  %v442 = vld [vmem:[%s2 + $0x78] sm:$0xff]
  %v443 = vld [vmem:[%s2 + $0x80] sm:$0xff]
  %v444 = vld [vmem:[%s2 + $0x88] sm:$0xff]
  %v445 = vld [vmem:[%s2 + $0x90] sm:$0xff]
  %v446 = vld [vmem:[%s2 + $0x98] sm:$0xff]
  %v447 = vld [vmem:[%s2 + $0xa0] sm:$0xff]
  %v448 = vld [vmem:[%s2 + $0xa8] sm:$0xff]
  %v449 = vld [vmem:[%s2 + $0xb0] sm:$0xff]
  %v450 = vld [vmem:[%s2 + $0xb8] sm:$0xff]
  %v451 = vld [vmem:[%s2 + $0xc0] sm:$0x3]
  %v452 = vld [vmem:[%s2 + $0xc8] sm:$0x3]
  %v454 = vsel %vm81, %v428, 0
  %v457 = vsel %vm81, %v430, 0
  %v460 = vsel %vm81, %v432, 0
  %v463 = vsel %vm81, %v434, 0
  %v466 = vsel %vm81, %v436, 0
  %v469 = vsel %vm81, %v438, 0
  %v472 = vsel %vm81, %v440, 0
  %v475 = vsel %vm81, %v442, 0
  %v478 = vsel %vm81, %v444, 0
  %v481 = vsel %vm81, %v446, 0
  %v484 = vsel %vm81, %v448, 0
  %v487 = vsel %vm81, %v450, 0
  %v490 = vsel %vm81, %v452, 0
  %492 = vmatpush.msra.mxu0 %v38
  %493 = vmatpush.msra.mxu0 %v37
  %494 = vmatpush.msra.mxu0 %v36
  %495 = vmatpush.msra.mxu0 %v35
  %496 = vmatpush.msra.mxu0 %v34
  %497 = vmatpush.msra.mxu0 %v33
  %498 = vmatpush.msra.mxu0 %v32
  %499 = vmatpush.msra.mxu0 %v31
  %500 = vmatpush.msra.mxu0 %v30
  %501 = vmatpush.msra.mxu0 %v29
  %502 = vmatpush.msra.mxu0 %v28
  %503 = vmatpush.msra.mxu0 %v27
  %504 = vmatpush.msra.mxu0 %v26
  %505 = vmatpush.msra.mxu0 %v25
  %506 = vmatpush.msra.mxu0 %v24
  %507 = vmatpush.msra.mxu0 %v23
  %508 = vmatmul.f32.gmra.mxu0 %v427
  %v509 = vpop.f32.mrf.mxu0
  %v510 = vadd.f32 0.0, %v509
  %511 = vmatmul.f32.gmra.mxu0 %v429
  %v512 = vpop.f32.mrf.mxu0
  %v513 = vadd.f32 0.0, %v512
  %514 = vmatmul.f32.gmra.mxu0 %v431
  %v515 = vpop.f32.mrf.mxu0
  %v516 = vadd.f32 0.0, %v515
  %517 = vmatmul.f32.gmra.mxu0 %v433
  %v518 = vpop.f32.mrf.mxu0
  %v519 = vadd.f32 0.0, %v518
  %520 = vmatmul.f32.gmra.mxu0 %v435
  %v521 = vpop.f32.mrf.mxu0
  %v522 = vadd.f32 0.0, %v521
  %523 = vmatmul.f32.gmra.mxu0 %v437
  %v524 = vpop.f32.mrf.mxu0
  %v525 = vadd.f32 0.0, %v524
  %526 = vmatmul.f32.gmra.mxu0 %v439
  %v527 = vpop.f32.mrf.mxu0
  %v528 = vadd.f32 0.0, %v527
  %529 = vmatmul.f32.gmra.mxu0 %v441
  %v530 = vpop.f32.mrf.mxu0
  %v531 = vadd.f32 0.0, %v530
  %532 = vmatmul.f32.gmra.mxu0 %v443
  %v533 = vpop.f32.mrf.mxu0
  %v534 = vadd.f32 0.0, %v533
  %535 = vmatmul.f32.gmra.mxu0 %v445
  %v536 = vpop.f32.mrf.mxu0
  %v537 = vadd.f32 0.0, %v536
  %538 = vmatmul.f32.gmra.mxu0 %v447
  %v539 = vpop.f32.mrf.mxu0
  %v540 = vadd.f32 0.0, %v539
  %541 = vmatmul.f32.gmra.mxu0 %v449
  %v542 = vpop.f32.mrf.mxu0
  %v543 = vadd.f32 0.0, %v542
  %544 = vmatmul.f32.gmra.mxu0 %v451
  %v545 = vpop.f32.mrf.mxu0
  %v546 = vadd.f32 0.0, %v545
  %547 = vdwg.mxu0
  %548 = vmatpush.msra.mxu0 %v123
  %549 = vmatpush.msra.mxu0 %v53
  %550 = vmatpush.msra.mxu0 %v52
  %551 = vmatpush.msra.mxu0 %v51
  %552 = vmatpush.msra.mxu0 %v50
  %553 = vmatpush.msra.mxu0 %v49
  %554 = vmatpush.msra.mxu0 %v48
  %555 = vmatpush.msra.mxu0 %v47
  %556 = vmatpush.msra.mxu0 %v46
  %557 = vmatpush.msra.mxu0 %v45
  %558 = vmatpush.msra.mxu0 %v44
  %559 = vmatpush.msra.mxu0 %v43
  %560 = vmatpush.msra.mxu0 %v42
  %561 = vmatpush.msra.mxu0 %v41
  %562 = vmatpush.msra.mxu0 %v40
  %563 = vmatpush.msra.mxu0 %v39
  %564 = vmatmul.f32.gmra.mxu0 %v454
  %v565 = vpop.f32.mrf.mxu0
  %v566 = vadd.f32 %v510, %v565
  %567 = vmatmul.f32.gmra.mxu0 %v457
  %v568 = vpop.f32.mrf.mxu0
  %v569 = vadd.f32 %v513, %v568
  %570 = vmatmul.f32.gmra.mxu0 %v460
  %v571 = vpop.f32.mrf.mxu0
  %v572 = vadd.f32 %v516, %v571
  %573 = vmatmul.f32.gmra.mxu0 %v463
  %v574 = vpop.f32.mrf.mxu0
  %v575 = vadd.f32 %v519, %v574
  %576 = vmatmul.f32.gmra.mxu0 %v466
  %v577 = vpop.f32.mrf.mxu0
  %v578 = vadd.f32 %v522, %v577
  %579 = vmatmul.f32.gmra.mxu0 %v469
  %v580 = vpop.f32.mrf.mxu0
  %v581 = vadd.f32 %v525, %v580
  %582 = vmatmul.f32.gmra.mxu0 %v472
  %v583 = vpop.f32.mrf.mxu0
  %v584 = vadd.f32 %v528, %v583
  %585 = vmatmul.f32.gmra.mxu0 %v475
  %v586 = vpop.f32.mrf.mxu0
  %v587 = vadd.f32 %v531, %v586
  %588 = vmatmul.f32.gmra.mxu0 %v478
  %v589 = vpop.f32.mrf.mxu0
  %v590 = vadd.f32 %v534, %v589
  %591 = vmatmul.f32.gmra.mxu0 %v481
  %v592 = vpop.f32.mrf.mxu0
  %v593 = vadd.f32 %v537, %v592
  %594 = vmatmul.f32.gmra.mxu0 %v484
  %v595 = vpop.f32.mrf.mxu0
  %v596 = vadd.f32 %v540, %v595
  %597 = vmatmul.f32.gmra.mxu0 %v487
  %v598 = vpop.f32.mrf.mxu0
  %v599 = vadd.f32 %v543, %v598
  %600 = vmatmul.f32.gmra.mxu0 %v490
  %v601 = vpop.f32.mrf.mxu0
  %v602 = vadd.f32 %v546, %v601
  %603 = vdwg.mxu0
  %v604 = vld [vmem:[%s3] sm:$0xff]
  %v605 = vld [vmem:[%s3 + $0x8] sm:$0xff]
  %v606 = vld [vmem:[%s3 + $0x10] sm:$0xff]
  %v607 = vld [vmem:[%s3 + $0x18] sm:$0xff]
  %v608 = vld [vmem:[%s3 + $0x20] sm:$0xff]
  %v609 = vld [vmem:[%s3 + $0x28] sm:$0xff]
  %v610 = vld [vmem:[%s3 + $0x30] sm:$0xff]
  %v611 = vld [vmem:[%s3 + $0x38] sm:$0xff]
  %v612 = vld [vmem:[%s3 + $0x40] sm:$0xff]
  %v613 = vld [vmem:[%s3 + $0x48] sm:$0xff]
  %v614 = vld [vmem:[%s3 + $0x50] sm:$0xff]
  %v615 = vld [vmem:[%s3 + $0x58] sm:$0xff]
  %v616 = vld [vmem:[%s3 + $0x60] sm:$0xff]
  %v617 = vld [vmem:[%s3 + $0x68] sm:$0xff]
  %v618 = vld [vmem:[%s3 + $0x70] sm:$0xff]
  %v619 = vld [vmem:[%s3 + $0x78] sm:$0xff]
  %v620 = vld [vmem:[%s3 + $0x80] sm:$0xff]
  %v621 = vld [vmem:[%s3 + $0x88] sm:$0xff]
  %v622 = vld [vmem:[%s3 + $0x90] sm:$0xff]
  %v623 = vld [vmem:[%s3 + $0x98] sm:$0xff]
  %v624 = vld [vmem:[%s3 + $0xa0] sm:$0xff]
  %v625 = vld [vmem:[%s3 + $0xa8] sm:$0xff]
  %v626 = vld [vmem:[%s3 + $0xb0] sm:$0xff]
  %v627 = vld [vmem:[%s3 + $0xb8] sm:$0xff]
  %v628 = vld [vmem:[%s3 + $0xc0] sm:$0x3]
  %v629 = vld [vmem:[%s3 + $0xc8] sm:$0x3]
  %v631 = vsel %vm81, %v605, 0
  %v634 = vsel %vm81, %v607, 0
  %v637 = vsel %vm81, %v609, 0
  %v640 = vsel %vm81, %v611, 0
  %v643 = vsel %vm81, %v613, 0
  %v646 = vsel %vm81, %v615, 0
  %v649 = vsel %vm81, %v617, 0
  %v652 = vsel %vm81, %v619, 0
  %v655 = vsel %vm81, %v621, 0
  %v658 = vsel %vm81, %v623, 0
  %v661 = vsel %vm81, %v625, 0
  %v664 = vsel %vm81, %v627, 0
  %v667 = vsel %vm81, %v629, 0
  %669 = vmatpush.msra.mxu0 %v38
  %670 = vmatpush.msra.mxu0 %v37
  %671 = vmatpush.msra.mxu0 %v36
  %672 = vmatpush.msra.mxu0 %v35
  %673 = vmatpush.msra.mxu0 %v34
  %674 = vmatpush.msra.mxu0 %v33
  %675 = vmatpush.msra.mxu0 %v32
  %676 = vmatpush.msra.mxu0 %v31
  %677 = vmatpush.msra.mxu0 %v30
  %678 = vmatpush.msra.mxu0 %v29
  %679 = vmatpush.msra.mxu0 %v28
  %680 = vmatpush.msra.mxu0 %v27
  %681 = vmatpush.msra.mxu0 %v26
  %682 = vmatpush.msra.mxu0 %v25
  %683 = vmatpush.msra.mxu0 %v24
  %684 = vmatpush.msra.mxu0 %v23
  %685 = vmatmul.f32.gmra.mxu0 %v604
  %v686 = vpop.f32.mrf.mxu0
  %v687 = vadd.f32 0.0, %v686
  %688 = vmatmul.f32.gmra.mxu0 %v606
  %v689 = vpop.f32.mrf.mxu0
  %v690 = vadd.f32 0.0, %v689
  %691 = vmatmul.f32.gmra.mxu0 %v608
  %v692 = vpop.f32.mrf.mxu0
  %v693 = vadd.f32 0.0, %v692
  %694 = vmatmul.f32.gmra.mxu0 %v610
  %v695 = vpop.f32.mrf.mxu0
  %v696 = vadd.f32 0.0, %v695
  %697 = vmatmul.f32.gmra.mxu0 %v612
  %v698 = vpop.f32.mrf.mxu0
  %v699 = vadd.f32 0.0, %v698
  %700 = vmatmul.f32.gmra.mxu0 %v614
  %v701 = vpop.f32.mrf.mxu0
  %v702 = vadd.f32 0.0, %v701
  %703 = vmatmul.f32.gmra.mxu0 %v616
  %v704 = vpop.f32.mrf.mxu0
  %v705 = vadd.f32 0.0, %v704
  %706 = vmatmul.f32.gmra.mxu0 %v618
  %v707 = vpop.f32.mrf.mxu0
  %v708 = vadd.f32 0.0, %v707
  %709 = vmatmul.f32.gmra.mxu0 %v620
  %v710 = vpop.f32.mrf.mxu0
  %v711 = vadd.f32 0.0, %v710
  %712 = vmatmul.f32.gmra.mxu0 %v622
  %v713 = vpop.f32.mrf.mxu0
  %v714 = vadd.f32 0.0, %v713
  %715 = vmatmul.f32.gmra.mxu0 %v624
  %v716 = vpop.f32.mrf.mxu0
  %v717 = vadd.f32 0.0, %v716
  %718 = vmatmul.f32.gmra.mxu0 %v626
  %v719 = vpop.f32.mrf.mxu0
  %v720 = vadd.f32 0.0, %v719
  %721 = vmatmul.f32.gmra.mxu0 %v628
  %v722 = vpop.f32.mrf.mxu0
  %v723 = vadd.f32 0.0, %v722
  %724 = vdwg.mxu0
  %725 = vmatpush.msra.mxu0 %v123
  %726 = vmatpush.msra.mxu0 %v53
  %727 = vmatpush.msra.mxu0 %v52
  %728 = vmatpush.msra.mxu0 %v51
  %729 = vmatpush.msra.mxu0 %v50
  %730 = vmatpush.msra.mxu0 %v49
  %731 = vmatpush.msra.mxu0 %v48
  %732 = vmatpush.msra.mxu0 %v47
  %733 = vmatpush.msra.mxu0 %v46
  %734 = vmatpush.msra.mxu0 %v45
  %735 = vmatpush.msra.mxu0 %v44
  %736 = vmatpush.msra.mxu0 %v43
  %737 = vmatpush.msra.mxu0 %v42
  %738 = vmatpush.msra.mxu0 %v41
  %739 = vmatpush.msra.mxu0 %v40
  %740 = vmatpush.msra.mxu0 %v39
  %741 = vmatmul.f32.gmra.mxu0 %v631
  %v742 = vpop.f32.mrf.mxu0
  %v743 = vadd.f32 %v687, %v742
  %744 = vmatmul.f32.gmra.mxu0 %v634
  %v745 = vpop.f32.mrf.mxu0
  %v746 = vadd.f32 %v690, %v745
  %747 = vmatmul.f32.gmra.mxu0 %v637
  %v748 = vpop.f32.mrf.mxu0
  %v749 = vadd.f32 %v693, %v748
  %750 = vmatmul.f32.gmra.mxu0 %v640
  %v751 = vpop.f32.mrf.mxu0
  %v752 = vadd.f32 %v696, %v751
  %753 = vmatmul.f32.gmra.mxu0 %v643
  %v754 = vpop.f32.mrf.mxu0
  %v755 = vadd.f32 %v699, %v754
  %756 = vmatmul.f32.gmra.mxu0 %v646
  %v757 = vpop.f32.mrf.mxu0
  %v758 = vadd.f32 %v702, %v757
  %759 = vmatmul.f32.gmra.mxu0 %v649
  %v760 = vpop.f32.mrf.mxu0
  %v761 = vadd.f32 %v705, %v760
  %762 = vmatmul.f32.gmra.mxu0 %v652
  %v763 = vpop.f32.mrf.mxu0
  %v764 = vadd.f32 %v708, %v763
  %765 = vmatmul.f32.gmra.mxu0 %v655
  %v766 = vpop.f32.mrf.mxu0
  %v767 = vadd.f32 %v711, %v766
  %768 = vmatmul.f32.gmra.mxu0 %v658
  %v769 = vpop.f32.mrf.mxu0
  %v770 = vadd.f32 %v714, %v769
  %771 = vmatmul.f32.gmra.mxu0 %v661
  %v772 = vpop.f32.mrf.mxu0
  %v773 = vadd.f32 %v717, %v772
  %774 = vmatmul.f32.gmra.mxu0 %v664
  %v775 = vpop.f32.mrf.mxu0
  %v776 = vadd.f32 %v720, %v775
  %777 = vmatmul.f32.gmra.mxu0 %v667
  %v778 = vpop.f32.mrf.mxu0
  %v779 = vadd.f32 %v723, %v778
  %780 = vdwg.mxu0
  %v781 = vmax.f32 %v566, %v743
  %v782 = vmax.f32 %v569, %v746
  %v783 = vmax.f32 %v572, %v749
  %v784 = vmax.f32 %v575, %v752
  %v785 = vmax.f32 %v578, %v755
  %v786 = vmax.f32 %v581, %v758
  %v787 = vmax.f32 %v584, %v761
  %v788 = vmax.f32 %v587, %v764
  %v789 = vmax.f32 %v590, %v767
  %v790 = vmax.f32 %v593, %v770
  %v791 = vmax.f32 %v596, %v773
  %v792 = vmax.f32 %v599, %v776
  %v793 = vmax.f32 %v602, %v779
  %v794 = vmax.f32 %v414, %v781
  %v795 = vmax.f32 %v415, %v782
  %v796 = vmax.f32 %v416, %v783
  %v797 = vmax.f32 %v417, %v784
  %v798 = vmax.f32 %v418, %v785
  %v799 = vmax.f32 %v419, %v786
  %v800 = vmax.f32 %v420, %v787
  %v801 = vmax.f32 %v421, %v788
  %v802 = vmax.f32 %v422, %v789
  %v803 = vmax.f32 %v423, %v790
  %v804 = vmax.f32 %v424, %v791
  %v805 = vmax.f32 %v425, %v792
  %v806 = vmax.f32 %v426, %v793
  %v807 = vld [vmem:[%s5] sm:$0x1]
  %v809 = vperm.slane %v807, 0
  %v811 = vadd.f32 %v794, %v809
  %v812 = vadd.f32 %v795, %v809
  %v813 = vadd.f32 %v796, %v809
  %v814 = vadd.f32 %v797, %v809
  %v815 = vadd.f32 %v798, %v809
  %v816 = vadd.f32 %v799, %v809
  %v817 = vadd.f32 %v800, %v809
  %v818 = vadd.f32 %v801, %v809
  %v819 = vadd.f32 %v802, %v809
  %v820 = vadd.f32 %v803, %v809
  %v821 = vadd.f32 %v804, %v809
  %v822 = vadd.f32 %v805, %v809
  %v823 = vadd.f32 %v806, %v809
  %v824 = vmax.f32 %v811, 0.0
  %v825 = vmax.f32 %v812, 0.0
  %v826 = vmax.f32 %v813, 0.0
  %v827 = vmax.f32 %v814, 0.0
  %v828 = vmax.f32 %v815, 0.0
  %v829 = vmax.f32 %v816, 0.0
  %v830 = vmax.f32 %v817, 0.0
  %v831 = vmax.f32 %v818, 0.0
  %v832 = vmax.f32 %v819, 0.0
  %v833 = vmax.f32 %v820, 0.0
  %v834 = vmax.f32 %v821, 0.0
  %v835 = vmax.f32 %v822, 0.0
  %v836 = vmax.f32 %v823, 0.0
  %vm837 = vcmask 261120
  %838 = vst.msk [vmem:[%s6] sm:$0xff] %vm837, %v824
  %839 = vst.msk [vmem:[%s6 + $0x8] sm:$0xff] %vm837, %v825
  %840 = vst.msk [vmem:[%s6 + $0x10] sm:$0xff] %vm837, %v826
  %841 = vst.msk [vmem:[%s6 + $0x18] sm:$0xff] %vm837, %v827
  %842 = vst.msk [vmem:[%s6 + $0x20] sm:$0xff] %vm837, %v828
  %843 = vst.msk [vmem:[%s6 + $0x28] sm:$0xff] %vm837, %v829
  %844 = vst.msk [vmem:[%s6 + $0x30] sm:$0xff] %vm837, %v830
  %845 = vst.msk [vmem:[%s6 + $0x38] sm:$0xff] %vm837, %v831
  %846 = vst.msk [vmem:[%s6 + $0x40] sm:$0xff] %vm837, %v832
  %847 = vst.msk [vmem:[%s6 + $0x48] sm:$0xff] %vm837, %v833
  %848 = vst.msk [vmem:[%s6 + $0x50] sm:$0xff] %vm837, %v834
  %849 = vst.msk [vmem:[%s6 + $0x58] sm:$0xff] %vm837, %v835
  %vm850 = vcmask 254976
  %851 = vst.msk [vmem:[%s6 + $0x60] sm:$0x3] %vm850, %v836
  // Predicated region
  $region26: #{mnist_classifier_forward.4} parent=0 // pred_check
    _
  $region27: #{mnist_classifier_forward.4} parent=0 // pred_check_branch
    %853 = sbr.rel (0) target = $region29
  $region28: #{mnist_classifier_forward.4} parent=0 // pred_region
    _
  $region29: #{mnist_classifier_forward.4} parent=0 // pred_fallthru
    _
  // Predicated region
  $region30: #{mnist_classifier_forward.4} parent=0 // pred_check
    _
  $region31: #{mnist_classifier_forward.4} parent=0 // pred_check_branch
    %855 = sbr.rel (0) target = $region33
  $region32: #{mnist_classifier_forward.4} parent=0 // pred_region
    _
  $region33: #{mnist_classifier_forward.4} parent=0 // pred_fallthru
    _

// kernel: mnist_classifier_forward.5
$region0: #{mnist_classifier_forward.5}
  #allocation0 [shape = 'u32[]', space=smem, size = 0x4, offset = 0x4, fixed_abs, tag = 'smem constant byte address 0x4 - core index']
  #allocation1 [shape = 'u32[72,128]{1,0:T(1,128)}', space=vmem, size = 0x9000, scoped, tag = 'internal scratch']
  %s0 = inlined_call_operand.vmem [shape: f32[2,1568], index: 0, kind: input, shape index: {}]
  %s1 = inlined_call_operand.vmem [shape: f32[1568,10], index: 1, kind: input, shape index: {}]
  %s2 = inlined_call_operand.vmem [shape: f32[1,10], index: 2, kind: input, shape index: {}]
  %s3 = inlined_call_operand.hbm [shape: f32[2,10], index: 3, kind: output, shape index: {}]
  %s4 = sld [smem:[#allocation0]]
  $region22: #{mnist_classifier_forward.5} parent=0
    _
  %s6 = ssub.s32 1, %s4
  %s7 = scalar_select 0, %s6, %s4
  $region1: #{mnist_classifier_forward.5} parent=0
    #allocation2 [shape = 'u8[1024]{0}', space=vmem, size = 0x400, scoped, tag = 'output window, operand 0, single buffered']
    #allocation3 [shape = 's32[1]{0}', space=sflag, size = 0x4, scoped, tag = 'scoped memory for mnist_classifier_forward.5']
    %8 = vsyncpa [#allocation3], 0
    // Predicated region
    $region2: #{mnist_classifier_forward.5} parent=1 // pred_check
      _
    $region3: #{mnist_classifier_forward.5} parent=1 // pred_check_branch
      %10 = sbr.rel (0) target = $region5
    $region4: #{mnist_classifier_forward.5} parent=1 // pred_region
      _
    $region5: #{mnist_classifier_forward.5} parent=1 // pred_fallthru
      _
    // Predicated region
    $region6: #{mnist_classifier_forward.5} parent=1 // pred_check
      _
    $region7: #{mnist_classifier_forward.5} parent=1 // pred_check_branch
      %12 = sbr.rel (0) target = $region9
    $region8: #{mnist_classifier_forward.5} parent=1 // pred_region
      _
    $region9: #{mnist_classifier_forward.5} parent=1 // pred_fallthru
      _
    // Predicated region
    $region10: #{mnist_classifier_forward.5} parent=1 // pred_check
      _
    $region11: #{mnist_classifier_forward.5} parent=1 // pred_check_branch
      %14 = sbr.rel (0) target = $region13
    $region12: #{mnist_classifier_forward.5} parent=1 // pred_region
      _
    $region13: #{mnist_classifier_forward.5} parent=1 // pred_fallthru
      _
    %v15 = vld [vmem:[%s0] sm:$0xff]
    %v16 = vld [vmem:[%s0 + $0x8] sm:$0xff]
    %v17 = vld [vmem:[%s0 + $0x10] sm:$0xff]
    %v18 = vld [vmem:[%s0 + $0x18] sm:$0x3]
    %v19 = vld [vmem:[%s1] sm:$0xff]
    %v20 = vld [vmem:[%s1 + $0x8] sm:$0xff]
    %v21 = vld [vmem:[%s1 + $0x10] sm:$0xff]
    %v22 = vld [vmem:[%s1 + $0x18] sm:$0xff]
    %v23 = vld [vmem:[%s1 + $0x20] sm:$0xff]
    %v24 = vld [vmem:[%s1 + $0x28] sm:$0xff]
    %v25 = vld [vmem:[%s1 + $0x30] sm:$0xff]
    %v26 = vld [vmem:[%s1 + $0x38] sm:$0xff]
    %v27 = vld [vmem:[%s1 + $0x40] sm:$0xff]
    %v28 = vld [vmem:[%s1 + $0x48] sm:$0xff]
    %v29 = vld [vmem:[%s1 + $0x50] sm:$0xff]
    %v30 = vld [vmem:[%s1 + $0x58] sm:$0xff]
    %v31 = vld [vmem:[%s1 + $0x60] sm:$0xff]
    %v32 = vld [vmem:[%s1 + $0x68] sm:$0xff]
    %v33 = vld [vmem:[%s1 + $0x70] sm:$0xff]
    %v34 = vld [vmem:[%s1 + $0x78] sm:$0xff]
    %v35 = vld [vmem:[%s1 + $0x80] sm:$0xff]
    %v36 = vld [vmem:[%s1 + $0x88] sm:$0xff]
    %v37 = vld [vmem:[%s1 + $0x90] sm:$0xff]
    %v38 = vld [vmem:[%s1 + $0x98] sm:$0xff]
    %v39 = vld [vmem:[%s1 + $0xa0] sm:$0xff]
    %v40 = vld [vmem:[%s1 + $0xa8] sm:$0xff]
    %v41 = vld [vmem:[%s1 + $0xb0] sm:$0xff]
    %v42 = vld [vmem:[%s1 + $0xb8] sm:$0xff]
    %v43 = vld [vmem:[%s1 + $0xc0] sm:$0xff]
    %v44 = vld [vmem:[%s1 + $0xc8] sm:$0xff]
    %v45 = vld [vmem:[%s1 + $0xd0] sm:$0xff]
    %v46 = vld [vmem:[%s1 + $0xd8] sm:$0xff]
    %v47 = vld [vmem:[%s1 + $0xe0] sm:$0xff]
    %v48 = vld [vmem:[%s1 + $0xe8] sm:$0xff]
    %v49 = vld [vmem:[%s1 + $0xf0] sm:$0xff]
    %v50 = vld [vmem:[%s1 + $0xf8] sm:$0xff]
    %v51 = vld [vmem:[%s1 + $0x100] sm:$0xff]
    %v52 = vld [vmem:[%s1 + $0x108] sm:$0xff]
    %v53 = vld [vmem:[%s1 + $0x110] sm:$0xff]
    %v54 = vld [vmem:[%s1 + $0x118] sm:$0xff]
    %v55 = vld [vmem:[%s1 + $0x120] sm:$0xff]
    %v56 = vld [vmem:[%s1 + $0x128] sm:$0xff]
    %v57 = vld [vmem:[%s1 + $0x130] sm:$0xff]
    %v58 = vld [vmem:[%s1 + $0x138] sm:$0xff]
    %v59 = vld [vmem:[%s1 + $0x140] sm:$0xff]
    %v60 = vld [vmem:[%s1 + $0x148] sm:$0xff]
    %v61 = vld [vmem:[%s1 + $0x150] sm:$0xff]
    %v62 = vld [vmem:[%s1 + $0x158] sm:$0xff]
    %v63 = vld [vmem:[%s1 + $0x160] sm:$0xff]
    %v64 = vld [vmem:[%s1 + $0x168] sm:$0xff]
    %v65 = vld [vmem:[%s1 + $0x170] sm:$0xff]
    %v66 = vld [vmem:[%s1 + $0x178] sm:$0xff]
    %v67 = vld [vmem:[%s1 + $0x180] sm:$0xff]
    %v68 = vld [vmem:[%s1 + $0x188] sm:$0xff]
    %v69 = vld [vmem:[%s1 + $0x190] sm:$0xff]
    %v70 = vld [vmem:[%s1 + $0x198] sm:$0xff]
    %v71 = vld [vmem:[%s1 + $0x1a0] sm:$0xff]
    %v72 = vld [vmem:[%s1 + $0x1a8] sm:$0xff]
    %v73 = vld [vmem:[%s1 + $0x1b0] sm:$0xff]
    %v74 = vld [vmem:[%s1 + $0x1b8] sm:$0xff]
    %v75 = vld [vmem:[%s1 + $0x1c0] sm:$0xff]
    %v76 = vld [vmem:[%s1 + $0x1c8] sm:$0xff]
    %v77 = vld [vmem:[%s1 + $0x1d0] sm:$0xff]
    %v78 = vld [vmem:[%s1 + $0x1d8] sm:$0xff]
    %v79 = vld [vmem:[%s1 + $0x1e0] sm:$0xff]
    %v80 = vld [vmem:[%s1 + $0x1e8] sm:$0xff]
    %v81 = vld [vmem:[%s1 + $0x1f0] sm:$0xff]
    %v82 = vld [vmem:[%s1 + $0x1f8] sm:$0xff]
    %v83 = vld [vmem:[%s1 + $0x200] sm:$0xff]
    %v84 = vld [vmem:[%s1 + $0x208] sm:$0xff]
    %v85 = vld [vmem:[%s1 + $0x210] sm:$0xff]
    %v86 = vld [vmem:[%s1 + $0x218] sm:$0xff]
    %v87 = vld [vmem:[%s1 + $0x220] sm:$0xff]
    %v88 = vld [vmem:[%s1 + $0x228] sm:$0xff]
    %v89 = vld [vmem:[%s1 + $0x230] sm:$0xff]
    %v90 = vld [vmem:[%s1 + $0x238] sm:$0xff]
    %v91 = vld [vmem:[%s1 + $0x240] sm:$0xff]
    %v92 = vld [vmem:[%s1 + $0x248] sm:$0xff]
    %v93 = vld [vmem:[%s1 + $0x250] sm:$0xff]
    %v94 = vld [vmem:[%s1 + $0x258] sm:$0xff]
    %v95 = vld [vmem:[%s1 + $0x260] sm:$0xff]
    %v96 = vld [vmem:[%s1 + $0x268] sm:$0xff]
    %v97 = vld [vmem:[%s1 + $0x270] sm:$0xff]
    %v98 = vld [vmem:[%s1 + $0x278] sm:$0xff]
    %v99 = vld [vmem:[%s1 + $0x280] sm:$0xff]
    %v100 = vld [vmem:[%s1 + $0x288] sm:$0xff]
    %v101 = vld [vmem:[%s1 + $0x290] sm:$0xff]
    %v102 = vld [vmem:[%s1 + $0x298] sm:$0xff]
    %v103 = vld [vmem:[%s1 + $0x2a0] sm:$0xff]
    %v104 = vld [vmem:[%s1 + $0x2a8] sm:$0xff]
    %v105 = vld [vmem:[%s1 + $0x2b0] sm:$0xff]
    %v106 = vld [vmem:[%s1 + $0x2b8] sm:$0xff]
    %v107 = vld [vmem:[%s1 + $0x2c0] sm:$0xff]
    %v108 = vld [vmem:[%s1 + $0x2c8] sm:$0xff]
    %v109 = vld [vmem:[%s1 + $0x2d0] sm:$0xff]
    %v110 = vld [vmem:[%s1 + $0x2d8] sm:$0xff]
    %v111 = vld [vmem:[%s1 + $0x2e0] sm:$0xff]
    %v112 = vld [vmem:[%s1 + $0x2e8] sm:$0xff]
    %v113 = vld [vmem:[%s1 + $0x2f0] sm:$0xff]
    %v114 = vld [vmem:[%s1 + $0x2f8] sm:$0xff]
    %v115 = vld [vmem:[%s1 + $0x300] sm:$0xff]
    %v116 = vld [vmem:[%s1 + $0x308] sm:$0xff]
    %v117 = vld [vmem:[%s1 + $0x310] sm:$0xff]
    %v118 = vld [vmem:[%s1 + $0x318] sm:$0xff]
    %v119 = vld [vmem:[%s1 + $0x320] sm:$0xff]
    %v120 = vld [vmem:[%s1 + $0x328] sm:$0xff]
    %v121 = vld [vmem:[%s1 + $0x330] sm:$0xff]
    %v122 = vld [vmem:[%s1 + $0x338] sm:$0xff]
    %v123 = vld [vmem:[%s1 + $0x340] sm:$0xff]
    %v124 = vld [vmem:[%s1 + $0x348] sm:$0xff]
    %v125 = vld [vmem:[%s1 + $0x350] sm:$0xff]
    %v126 = vld [vmem:[%s1 + $0x358] sm:$0xff]
    %v127 = vld [vmem:[%s1 + $0x360] sm:$0xff]
    %v128 = vld [vmem:[%s1 + $0x368] sm:$0xff]
    %v129 = vld [vmem:[%s1 + $0x370] sm:$0xff]
    %v130 = vld [vmem:[%s1 + $0x378] sm:$0xff]
    %v131 = vld [vmem:[%s1 + $0x380] sm:$0xff]
    %v132 = vld [vmem:[%s1 + $0x388] sm:$0xff]
    %v133 = vld [vmem:[%s1 + $0x390] sm:$0xff]
    %v134 = vld [vmem:[%s1 + $0x398] sm:$0xff]
    %v135 = vld [vmem:[%s1 + $0x3a0] sm:$0xff]
    %v136 = vld [vmem:[%s1 + $0x3a8] sm:$0xff]
    %v137 = vld [vmem:[%s1 + $0x3b0] sm:$0xff]
    %v138 = vld [vmem:[%s1 + $0x3b8] sm:$0xff]
    %v139 = vld [vmem:[%s1 + $0x3c0] sm:$0xff]
    %v140 = vld [vmem:[%s1 + $0x3c8] sm:$0xff]
    %v141 = vld [vmem:[%s1 + $0x3d0] sm:$0xff]
    %v142 = vld [vmem:[%s1 + $0x3d8] sm:$0xff]
    %v143 = vld [vmem:[%s1 + $0x3e0] sm:$0xff]
    %v144 = vld [vmem:[%s1 + $0x3e8] sm:$0xff]
    %v145 = vld [vmem:[%s1 + $0x3f0] sm:$0xff]
    %v146 = vld [vmem:[%s1 + $0x3f8] sm:$0xff]
    %v147 = vld [vmem:[%s1 + $0x400] sm:$0xff]
    %v148 = vld [vmem:[%s1 + $0x408] sm:$0xff]
    %v149 = vld [vmem:[%s1 + $0x410] sm:$0xff]
    %v150 = vld [vmem:[%s1 + $0x418] sm:$0xff]
    %v151 = vld [vmem:[%s1 + $0x420] sm:$0xff]
    %v152 = vld [vmem:[%s1 + $0x428] sm:$0xff]
    %v153 = vld [vmem:[%s1 + $0x430] sm:$0xff]
    %v154 = vld [vmem:[%s1 + $0x438] sm:$0xff]
    %v155 = vld [vmem:[%s1 + $0x440] sm:$0xff]
    %v156 = vld [vmem:[%s1 + $0x448] sm:$0xff]
    %v157 = vld [vmem:[%s1 + $0x450] sm:$0xff]
    %v158 = vld [vmem:[%s1 + $0x458] sm:$0xff]
    %v159 = vld [vmem:[%s1 + $0x460] sm:$0xff]
    %v160 = vld [vmem:[%s1 + $0x468] sm:$0xff]
    %v161 = vld [vmem:[%s1 + $0x470] sm:$0xff]
    %v162 = vld [vmem:[%s1 + $0x478] sm:$0xff]
    %v163 = vld [vmem:[%s1 + $0x480] sm:$0xff]
    %v164 = vld [vmem:[%s1 + $0x488] sm:$0xff]
    %v165 = vld [vmem:[%s1 + $0x490] sm:$0xff]
    %v166 = vld [vmem:[%s1 + $0x498] sm:$0xff]
    %v167 = vld [vmem:[%s1 + $0x4a0] sm:$0xff]
    %v168 = vld [vmem:[%s1 + $0x4a8] sm:$0xff]
    %v169 = vld [vmem:[%s1 + $0x4b0] sm:$0xff]
    %v170 = vld [vmem:[%s1 + $0x4b8] sm:$0xff]
    %v171 = vld [vmem:[%s1 + $0x4c0] sm:$0xff]
    %v172 = vld [vmem:[%s1 + $0x4c8] sm:$0xff]
    %v173 = vld [vmem:[%s1 + $0x4d0] sm:$0xff]
    %v174 = vld [vmem:[%s1 + $0x4d8] sm:$0xff]
    %v175 = vld [vmem:[%s1 + $0x4e0] sm:$0xff]
    %v176 = vld [vmem:[%s1 + $0x4e8] sm:$0xff]
    %v177 = vld [vmem:[%s1 + $0x4f0] sm:$0xff]
    %v178 = vld [vmem:[%s1 + $0x4f8] sm:$0xff]
    %v179 = vld [vmem:[%s1 + $0x500] sm:$0xff]
    %v180 = vld [vmem:[%s1 + $0x508] sm:$0xff]
    %v181 = vld [vmem:[%s1 + $0x510] sm:$0xff]
    %v182 = vld [vmem:[%s1 + $0x518] sm:$0xff]
    %v183 = vld [vmem:[%s1 + $0x520] sm:$0xff]
    %v184 = vld [vmem:[%s1 + $0x528] sm:$0xff]
    %v185 = vld [vmem:[%s1 + $0x530] sm:$0xff]
    %v186 = vld [vmem:[%s1 + $0x538] sm:$0xff]
    %v187 = vld [vmem:[%s1 + $0x540] sm:$0xff]
    %v188 = vld [vmem:[%s1 + $0x548] sm:$0xff]
    %v189 = vld [vmem:[%s1 + $0x550] sm:$0xff]
    %v190 = vld [vmem:[%s1 + $0x558] sm:$0xff]
    %v191 = vld [vmem:[%s1 + $0x560] sm:$0xff]
    %v192 = vld [vmem:[%s1 + $0x568] sm:$0xff]
    %v193 = vld [vmem:[%s1 + $0x570] sm:$0xff]
    %v194 = vld [vmem:[%s1 + $0x578] sm:$0xff]
    %v195 = vld [vmem:[%s1 + $0x580] sm:$0xff]
    %v196 = vld [vmem:[%s1 + $0x588] sm:$0xff]
    %v197 = vld [vmem:[%s1 + $0x590] sm:$0xff]
    %v198 = vld [vmem:[%s1 + $0x598] sm:$0xff]
    %v199 = vld [vmem:[%s1 + $0x5a0] sm:$0xff]
    %v200 = vld [vmem:[%s1 + $0x5a8] sm:$0xff]
    %v201 = vld [vmem:[%s1 + $0x5b0] sm:$0xff]
    %v202 = vld [vmem:[%s1 + $0x5b8] sm:$0xff]
    %v203 = vld [vmem:[%s1 + $0x5c0] sm:$0xff]
    %v204 = vld [vmem:[%s1 + $0x5c8] sm:$0xff]
    %v205 = vld [vmem:[%s1 + $0x5d0] sm:$0xff]
    %v206 = vld [vmem:[%s1 + $0x5d8] sm:$0xff]
    %v207 = vld [vmem:[%s1 + $0x5e0] sm:$0xff]
    %v208 = vld [vmem:[%s1 + $0x5e8] sm:$0xff]
    %v209 = vld [vmem:[%s1 + $0x5f0] sm:$0xff]
    %v210 = vld [vmem:[%s1 + $0x5f8] sm:$0xff]
    %v211 = vld [vmem:[%s1 + $0x600] sm:$0xff]
    %v212 = vld [vmem:[%s1 + $0x608] sm:$0xff]
    %v213 = vld [vmem:[%s1 + $0x610] sm:$0xff]
    %v214 = vld [vmem:[%s1 + $0x618] sm:$0xff]
    %v215 = vld [vmem:[%s2] sm:$0x1]
    %v217 = vperm.slane %v215, 0
    %223 = vst [vmem:[#allocation1] ss:$4 sm:$0xff] %v15
    %s224 = scalar_lea.vmem [#allocation1], 32
    %225 = vst [vmem:[%s224] ss:$4 sm:$0xff] %v16
    %v226 = vld.sshfl [vmem:[#allocation1] sm:$0xff pattern:$0x73625140]
    %v227 = vld.sshfl [vmem:[#allocation1 + $0x8] sm:$0xff pattern:$0x73625140]
    %v228 = vld.sshfl [vmem:[#allocation1 + $0x10] sm:$0xff pattern:$0x73625140]
    %v229 = vld.sshfl [vmem:[#allocation1 + $0x18] sm:$0xff pattern:$0x73625140]
    %v230 = vld.sshfl [vmem:[#allocation1 + $0x20] sm:$0xff pattern:$0x73625140]
    %v231 = vld.sshfl [vmem:[#allocation1 + $0x28] sm:$0xff pattern:$0x73625140]
    %v232 = vld.sshfl [vmem:[#allocation1 + $0x30] sm:$0xff pattern:$0x73625140]
    %v233 = vld.sshfl [vmem:[#allocation1 + $0x38] sm:$0xff pattern:$0x73625140]
    %234 = vst [vmem:[#allocation1] ss:$4 sm:$0xff] %v17
    %235 = vst [vmem:[%s224] ss:$4 sm:$0xff] %v18
    %v236 = vld.sshfl [vmem:[#allocation1] sm:$0xff pattern:$0x73625140]
    %v237 = vld.sshfl [vmem:[#allocation1 + $0x8] sm:$0xff pattern:$0x73625140]
    %v238 = vld.sshfl [vmem:[#allocation1 + $0x10] sm:$0xff pattern:$0x73625140]
    %v239 = vld.sshfl [vmem:[#allocation1 + $0x18] sm:$0xff pattern:$0x73625140]
    %v240 = vld.sshfl [vmem:[#allocation1 + $0x20] sm:$0xff pattern:$0x73625140]
    %vm253 = vcmask 261120
    %v254 = vsel %vm253, %v240, 0
    %256 = vmatpush.msra.mxu0 %v34
    %257 = vmatpush.msra.mxu0 %v33
    %258 = vmatpush.msra.mxu0 %v32
    %259 = vmatpush.msra.mxu0 %v31
    %260 = vmatpush.msra.mxu0 %v30
    %261 = vmatpush.msra.mxu0 %v29
    %262 = vmatpush.msra.mxu0 %v28
    %263 = vmatpush.msra.mxu0 %v27
    %264 = vmatpush.msra.mxu0 %v26
    %265 = vmatpush.msra.mxu0 %v25
    %266 = vmatpush.msra.mxu0 %v24
    %267 = vmatpush.msra.mxu0 %v23
    %268 = vmatpush.msra.mxu0 %v22
    %269 = vmatpush.msra.mxu0 %v21
    %270 = vmatpush.msra.mxu0 %v20
    %271 = vmatpush.msra.mxu0 %v19
    %272 = vmatmul.f32.gmra.mxu0 %v226
    %v273 = vpop.f32.mrf.mxu0
    %v274 = vadd.f32 %v217, %v273
    %275 = vdwg.mxu0
    %276 = vmatpush.msra.mxu0 %v50
    %277 = vmatpush.msra.mxu0 %v49
    %278 = vmatpush.msra.mxu0 %v48
    %279 = vmatpush.msra.mxu0 %v47
    %280 = vmatpush.msra.mxu0 %v46
    %281 = vmatpush.msra.mxu0 %v45
    %282 = vmatpush.msra.mxu0 %v44
    %283 = vmatpush.msra.mxu0 %v43
    %284 = vmatpush.msra.mxu0 %v42
    %285 = vmatpush.msra.mxu0 %v41
    %286 = vmatpush.msra.mxu0 %v40
    %287 = vmatpush.msra.mxu0 %v39
    %288 = vmatpush.msra.mxu0 %v38
    %289 = vmatpush.msra.mxu0 %v37
    %290 = vmatpush.msra.mxu0 %v36
    %291 = vmatpush.msra.mxu0 %v35
    %292 = vmatmul.f32.gmra.mxu0 %v227
    %v293 = vpop.f32.mrf.mxu0
    %v294 = vadd.f32 %v274, %v293
    %295 = vdwg.mxu0
    %296 = vmatpush.msra.mxu0 %v66
    %297 = vmatpush.msra.mxu0 %v65
    %298 = vmatpush.msra.mxu0 %v64
    %299 = vmatpush.msra.mxu0 %v63
    %300 = vmatpush.msra.mxu0 %v62
    %301 = vmatpush.msra.mxu0 %v61
    %302 = vmatpush.msra.mxu0 %v60
    %303 = vmatpush.msra.mxu0 %v59
    %304 = vmatpush.msra.mxu0 %v58
    %305 = vmatpush.msra.mxu0 %v57
    %306 = vmatpush.msra.mxu0 %v56
    %307 = vmatpush.msra.mxu0 %v55
    %308 = vmatpush.msra.mxu0 %v54
    %309 = vmatpush.msra.mxu0 %v53
    %310 = vmatpush.msra.mxu0 %v52
    %311 = vmatpush.msra.mxu0 %v51
    %312 = vmatmul.f32.gmra.mxu0 %v228
    %v313 = vpop.f32.mrf.mxu0
    %v314 = vadd.f32 %v294, %v313
    %315 = vdwg.mxu0
    %316 = vmatpush.msra.mxu0 %v82
    %317 = vmatpush.msra.mxu0 %v81
    %318 = vmatpush.msra.mxu0 %v80
    %319 = vmatpush.msra.mxu0 %v79
    %320 = vmatpush.msra.mxu0 %v78
    %321 = vmatpush.msra.mxu0 %v77
    %322 = vmatpush.msra.mxu0 %v76
    %323 = vmatpush.msra.mxu0 %v75
    %324 = vmatpush.msra.mxu0 %v74
    %325 = vmatpush.msra.mxu0 %v73
    %326 = vmatpush.msra.mxu0 %v72
    %327 = vmatpush.msra.mxu0 %v71
    %328 = vmatpush.msra.mxu0 %v70
    %329 = vmatpush.msra.mxu0 %v69
    %330 = vmatpush.msra.mxu0 %v68
    %331 = vmatpush.msra.mxu0 %v67
    %332 = vmatmul.f32.gmra.mxu0 %v229
    %v333 = vpop.f32.mrf.mxu0
    %v334 = vadd.f32 %v314, %v333
    %335 = vdwg.mxu0
    %336 = vmatpush.msra.mxu0 %v98
    %337 = vmatpush.msra.mxu0 %v97
    %338 = vmatpush.msra.mxu0 %v96
    %339 = vmatpush.msra.mxu0 %v95
    %340 = vmatpush.msra.mxu0 %v94
    %341 = vmatpush.msra.mxu0 %v93
    %342 = vmatpush.msra.mxu0 %v92
    %343 = vmatpush.msra.mxu0 %v91
    %344 = vmatpush.msra.mxu0 %v90
    %345 = vmatpush.msra.mxu0 %v89
    %346 = vmatpush.msra.mxu0 %v88
    %347 = vmatpush.msra.mxu0 %v87
    %348 = vmatpush.msra.mxu0 %v86
    %349 = vmatpush.msra.mxu0 %v85
    %350 = vmatpush.msra.mxu0 %v84
    %351 = vmatpush.msra.mxu0 %v83
    %352 = vmatmul.f32.gmra.mxu0 %v230
    %v353 = vpop.f32.mrf.mxu0
    %v354 = vadd.f32 %v334, %v353
    %355 = vdwg.mxu0
    %356 = vmatpush.msra.mxu0 %v114
    %357 = vmatpush.msra.mxu0 %v113
    %358 = vmatpush.msra.mxu0 %v112
    %359 = vmatpush.msra.mxu0 %v111
    %360 = vmatpush.msra.mxu0 %v110
    %361 = vmatpush.msra.mxu0 %v109
    %362 = vmatpush.msra.mxu0 %v108
    %363 = vmatpush.msra.mxu0 %v107
    %364 = vmatpush.msra.mxu0 %v106
    %365 = vmatpush.msra.mxu0 %v105
    %366 = vmatpush.msra.mxu0 %v104
    %367 = vmatpush.msra.mxu0 %v103
    %368 = vmatpush.msra.mxu0 %v102
    %369 = vmatpush.msra.mxu0 %v101
    %370 = vmatpush.msra.mxu0 %v100
    %371 = vmatpush.msra.mxu0 %v99
    %372 = vmatmul.f32.gmra.mxu0 %v231
    %v373 = vpop.f32.mrf.mxu0
    %v374 = vadd.f32 %v354, %v373
    %375 = vdwg.mxu0
    %376 = vmatpush.msra.mxu0 %v130
    %377 = vmatpush.msra.mxu0 %v129
    %378 = vmatpush.msra.mxu0 %v128
    %379 = vmatpush.msra.mxu0 %v127
    %380 = vmatpush.msra.mxu0 %v126
    %381 = vmatpush.msra.mxu0 %v125
    %382 = vmatpush.msra.mxu0 %v124
    %383 = vmatpush.msra.mxu0 %v123
    %384 = vmatpush.msra.mxu0 %v122
    %385 = vmatpush.msra.mxu0 %v121
    %386 = vmatpush.msra.mxu0 %v120
    %387 = vmatpush.msra.mxu0 %v119
    %388 = vmatpush.msra.mxu0 %v118
    %389 = vmatpush.msra.mxu0 %v117
    %390 = vmatpush.msra.mxu0 %v116
    %391 = vmatpush.msra.mxu0 %v115
    %392 = vmatmul.f32.gmra.mxu0 %v232
    %v393 = vpop.f32.mrf.mxu0
    %v394 = vadd.f32 %v374, %v393
    %395 = vdwg.mxu0
    %396 = vmatpush.msra.mxu0 %v146
    %397 = vmatpush.msra.mxu0 %v145
    %398 = vmatpush.msra.mxu0 %v144
    %399 = vmatpush.msra.mxu0 %v143
    %400 = vmatpush.msra.mxu0 %v142
    %401 = vmatpush.msra.mxu0 %v141
    %402 = vmatpush.msra.mxu0 %v140
    %403 = vmatpush.msra.mxu0 %v139
    %404 = vmatpush.msra.mxu0 %v138
    %405 = vmatpush.msra.mxu0 %v137
    %406 = vmatpush.msra.mxu0 %v136
    %407 = vmatpush.msra.mxu0 %v135
    %408 = vmatpush.msra.mxu0 %v134
    %409 = vmatpush.msra.mxu0 %v133
    %410 = vmatpush.msra.mxu0 %v132
    %411 = vmatpush.msra.mxu0 %v131
    %412 = vmatmul.f32.gmra.mxu0 %v233
    %v413 = vpop.f32.mrf.mxu0
    %v414 = vadd.f32 %v394, %v413
    %415 = vdwg.mxu0
    %416 = vmatpush.msra.mxu0 %v162
    %417 = vmatpush.msra.mxu0 %v161
    %418 = vmatpush.msra.mxu0 %v160
    %419 = vmatpush.msra.mxu0 %v159
    %420 = vmatpush.msra.mxu0 %v158
    %421 = vmatpush.msra.mxu0 %v157
    %422 = vmatpush.msra.mxu0 %v156
    %423 = vmatpush.msra.mxu0 %v155
    %424 = vmatpush.msra.mxu0 %v154
    %425 = vmatpush.msra.mxu0 %v153
    %426 = vmatpush.msra.mxu0 %v152
    %427 = vmatpush.msra.mxu0 %v151
    %428 = vmatpush.msra.mxu0 %v150
    %429 = vmatpush.msra.mxu0 %v149
    %430 = vmatpush.msra.mxu0 %v148
    %431 = vmatpush.msra.mxu0 %v147
    %432 = vmatmul.f32.gmra.mxu0 %v236
    %v433 = vpop.f32.mrf.mxu0
    %v434 = vadd.f32 %v414, %v433
    %435 = vdwg.mxu0
    %436 = vmatpush.msra.mxu0 %v178
    %437 = vmatpush.msra.mxu0 %v177
    %438 = vmatpush.msra.mxu0 %v176
    %439 = vmatpush.msra.mxu0 %v175
    %440 = vmatpush.msra.mxu0 %v174
    %441 = vmatpush.msra.mxu0 %v173
    %442 = vmatpush.msra.mxu0 %v172
    %443 = vmatpush.msra.mxu0 %v171
    %444 = vmatpush.msra.mxu0 %v170
    %445 = vmatpush.msra.mxu0 %v169
    %446 = vmatpush.msra.mxu0 %v168
    %447 = vmatpush.msra.mxu0 %v167
    %448 = vmatpush.msra.mxu0 %v166
    %449 = vmatpush.msra.mxu0 %v165
    %450 = vmatpush.msra.mxu0 %v164
    %451 = vmatpush.msra.mxu0 %v163
    %452 = vmatmul.f32.gmra.mxu0 %v237
    %v453 = vpop.f32.mrf.mxu0
    %v454 = vadd.f32 %v434, %v453
    %455 = vdwg.mxu0
    %456 = vmatpush.msra.mxu0 %v194
    %457 = vmatpush.msra.mxu0 %v193
    %458 = vmatpush.msra.mxu0 %v192
    %459 = vmatpush.msra.mxu0 %v191
    %460 = vmatpush.msra.mxu0 %v190
    %461 = vmatpush.msra.mxu0 %v189
    %462 = vmatpush.msra.mxu0 %v188
    %463 = vmatpush.msra.mxu0 %v187
    %464 = vmatpush.msra.mxu0 %v186
    %465 = vmatpush.msra.mxu0 %v185
    %466 = vmatpush.msra.mxu0 %v184
    %467 = vmatpush.msra.mxu0 %v183
    %468 = vmatpush.msra.mxu0 %v182
    %469 = vmatpush.msra.mxu0 %v181
    %470 = vmatpush.msra.mxu0 %v180
    %471 = vmatpush.msra.mxu0 %v179
    %472 = vmatmul.f32.gmra.mxu0 %v238
    %v473 = vpop.f32.mrf.mxu0
    %v474 = vadd.f32 %v454, %v473
    %475 = vdwg.mxu0
    %476 = vmatpush.msra.mxu0 %v210
    %477 = vmatpush.msra.mxu0 %v209
    %478 = vmatpush.msra.mxu0 %v208
    %479 = vmatpush.msra.mxu0 %v207
    %480 = vmatpush.msra.mxu0 %v206
    %481 = vmatpush.msra.mxu0 %v205
    %482 = vmatpush.msra.mxu0 %v204
    %483 = vmatpush.msra.mxu0 %v203
    %484 = vmatpush.msra.mxu0 %v202
    %485 = vmatpush.msra.mxu0 %v201
    %486 = vmatpush.msra.mxu0 %v200
    %487 = vmatpush.msra.mxu0 %v199
    %488 = vmatpush.msra.mxu0 %v198
    %489 = vmatpush.msra.mxu0 %v197
    %490 = vmatpush.msra.mxu0 %v196
    %491 = vmatpush.msra.mxu0 %v195
    %492 = vmatmul.f32.gmra.mxu0 %v239
    %v493 = vpop.f32.mrf.mxu0
    %v494 = vadd.f32 %v474, %v493
    %495 = vdwg.mxu0
    %496 = vmatpush.msra.mxu0 0.0
    %497 = vmatpush.msra.mxu0 0.0
    %498 = vmatpush.msra.mxu0 0.0
    %499 = vmatpush.msra.mxu0 0.0
    %500 = vmatpush.msra.mxu0 0.0
    %501 = vmatpush.msra.mxu0 0.0
    %502 = vmatpush.msra.mxu0 0.0
    %503 = vmatpush.msra.mxu0 0.0
    %504 = vmatpush.msra.mxu0 0.0
    %505 = vmatpush.msra.mxu0 0.0
    %506 = vmatpush.msra.mxu0 0.0
    %507 = vmatpush.msra.mxu0 0.0
    %508 = vmatpush.msra.mxu0 %v214
    %509 = vmatpush.msra.mxu0 %v213
    %510 = vmatpush.msra.mxu0 %v212
    %511 = vmatpush.msra.mxu0 %v211
    %512 = vmatmul.f32.gmra.mxu0 %v254
    %v513 = vpop.f32.mrf.mxu0
    %v514 = vadd.f32 %v494, %v513
    %515 = vdwg.mxu0
    %vm516 = vcmask 74752
    %517 = vst.msk [vmem:[#allocation2] sm:$0x3] %vm516, %v514
    // Predicated region
    $region14: #{mnist_classifier_forward.5} parent=1 // pred_check
      _
    $region15: #{mnist_classifier_forward.5} parent=1 // pred_check_branch
      %519 = sbr.rel (0) target = $region17
    $region16: #{mnist_classifier_forward.5} parent=1 // pred_region
      %521 = vsyncadd [#allocation3], 0
      %s523 = sshll.u32 [#allocation2], 4
      %s524 = int_to_ptr.vmem [resolvable:$true] %s523
      %s525 = sshll.u32 %s3, 4
      %s526 = int_to_ptr.hbm [resolvable:$true] %s525
      %528 = dma.vmem_to_hbm [thread:$0]  %s524, 32, %s526, [#allocation3]
    $region17: #{mnist_classifier_forward.5} parent=1 // pred_fallthru
      _
    // Predicated region
    $region18: #{mnist_classifier_forward.5} parent=1 // pred_check
      _
    $region19: #{mnist_classifier_forward.5} parent=1 // pred_check_branch
      %530 = sbr.rel (0) target = $region21
    $region20: #{mnist_classifier_forward.5} parent=1 // pred_region
      %532 = dma.done [#allocation3], 32
    $region21: #{mnist_classifier_forward.5} parent=1 // pred_fallthru
      _
    %533 = vsyncpa [#allocation3], 1

</llo_original>
